<compile_context>
chip_gen: v7x
topology: tpu7x:2x2x1
jax: 0.10.0
libtpu: 0.0.40
codegen_flags: <defaults>
</compile_context>

<pallas_src>
import numpy as np
import jax
import jax.numpy as jnp
from jax.experimental import pallas as pl
from jax.experimental.pallas import tpu as pltpu


def _l2_normalize(x, axis=-1, eps=1e-12):
    # matches torch.nn.functional.normalize(p=2): x / clamp_min(||x||_2, eps)
    n = jnp.sqrt(jnp.sum(x * x, axis=axis, keepdims=True))
    return x / jnp.maximum(n, eps)


def _group_indices(layer, order):
    """Replicates the binary-decomposition group enumeration of forward()."""
    groups, order_list = [], []
    for i in range(1, 2 ** (layer + 1)):
        idx = [j for j in range(layer + 1) if (i >> j) & 1]
        if len(idx) > order:
            continue
        groups.append(idx)
        order_list.append(len(idx))
    return groups, order_list


def _pick_bs_tile(bs_pad, T, D, budget_bytes=6 << 20):
    """Row tile over whole (b,s) softmax groups.  Multiple of 8, divides bs_pad,
    item block ~budget (double-buffered it stays well inside v7x's 64 MiB VMEM and
    the raised scoped limit on v5e/v6e), and capped so grid[0] >= 2 when possible
    so both v7x TensorCores are used on the 'parallel' axis."""
    cand = max(8, (budget_bytes // (T * D * 4)) // 8 * 8)
    if bs_pad >= 16:
        cand = min(cand, max(8, (bs_pad // 2) // 8 * 8))
    cand = min(cand, bs_pad)
    while cand > 8 and bs_pad % cand:
        cand -= 8
    return cand


# ----------------------------- Pallas kernel ---------------------------------
def _mta_kernel(item_ref, tar_ref, len_ref, w1_ref, w2_ref, bias_ref, wq_ref,
                out_ref, acc_ref, tar0_ref):
    g = pl.program_id(1)
    ng = pl.num_programs(1)

    @pl.when(g == 0)
    def _init():
        acc_ref[...] = jnp.zeros_like(acc_ref)

    bs, T, D = item_ref.shape
    rows = bs * T

    # In-kernel L2 normalization (== F.normalize(p=2, eps=1e-12)) of the raw layer
    # embeddings: a lane-reduce + rsqrt on data already resident in vregs, instead of
    # an extra HBM round trip in the wrapper.
    raw = item_ref[...]                                               # [bs, T, D]
    item = raw * jax.lax.rsqrt(
        jnp.maximum(jnp.sum(raw * raw, axis=-1, keepdims=True), 1e-24))

    traw = tar_ref[...]                                               # [bs, D]
    tar_n = traw * jax.lax.rsqrt(
        jnp.maximum(jnp.sum(traw * traw, axis=-1, keepdims=True), 1e-24))

    @pl.when(g == 0)
    def _stash():
        # group-0 target (unscaled, normalized) reused in the final matching step
        tar0_ref[...] = tar_n

    scale = jnp.where(g == 0, 1.0, 0.5)            # module scales non-first targets by 0.5
    tar = (tar_n * scale)[:, None, :]              # [bs, 1, D], broadcast over T

    # Two accumulated MXU dots (no [rows, 2D] concat temp).  Operands go bf16 when the
    # wrapper shipped bf16 weights (D >= 64); accumulation is always f32.
    mm_dtype = w1_ref.dtype
    lhs1 = item.reshape(rows, D).astype(mm_dtype)
    lhs2 = (item * tar).reshape(rows, D).astype(mm_dtype)
    h = jnp.dot(lhs1, w1_ref[g], preferred_element_type=jnp.float32)   # glu
    h = h + jnp.dot(lhs2, w2_ref[g], preferred_element_type=jnp.float32)  # glu2
    h = h.reshape(bs, T, D) + bias_ref[g][None]    # glu bias (+ pos @ Wglu^T when pos=True)
    s = jax.nn.sigmoid(h)                          # [bs, T, D]

    logits = jnp.sum(s * wq_ref[g][None], axis=-1, keepdims=True)      # [bs, T, 1]

    # Regenerate the multiplicative 0/1 mask from per-row valid lengths (compact
    # [bs,1] input instead of a ~128x lane-padded [bs,T,1] VMEM block).
    tpos = jax.lax.broadcasted_iota(jnp.int32, (bs, T, 1), 1)
    valid = (tpos < len_ref[...][:, None, :]).astype(jnp.float32)      # [bs, T, 1]
    masked = logits * valid                        # multiplicative mask (module semantics)

    # Max-stabilized softmax over T per (b,s) group.  NOTE: kept in the keepdims
    # [bs,T,1] layout for guaranteed lowering; the lane-sparse exp is the known
    # remaining EUP inefficiency flagged by the review.
    m = jnp.max(masked, axis=1, keepdims=True)
    e = jnp.exp(masked - m)
    beta = e * pl.reciprocal(jnp.sum(e, axis=1, keepdims=True), approx=False)

    acc_ref[...] += jnp.sum(item * beta, axis=1)   # [bs, D]

    @pl.when(g == ng - 1)
    def _finish():
        # multigrain_matching (use_tar_bias=False): order-2/3 branches contribute 0
        sess = acc_ref[...]
        sess_n = sess * jax.lax.rsqrt(
            jnp.maximum(jnp.sum(sess * sess, axis=-1, keepdims=True), 1e-24))
        out_ref[...] = jnp.sum((10.0 * sess_n) * tar0_ref[...],
                               axis=-1, keepdims=True)                 # [bs, 1]


# ------------------------------ wrapper --------------------------------------
def multigrain_target_attention(params, sess_layer, tar_layer, mask,
                                layer, order, pos=False, mxu_bf16=None):
    L, B, S, T, D = sess_layer.shape
    assert L == layer + 1
    assert order >= 1
    groups, order_list = _group_indices(layer, order)

    # Static dead-group filtering: the module computes every enumerated group but only
    # accumulates group 0 and order-1 groups -> kept groups are exactly the singleton
    # layer indices (group g uses sess_layer[g]/tar_layer[g]); weights are indexed by
    # the group's position in the full (order-filtered) enumeration.
    kept = [gi for gi in range(len(groups)) if gi == 0 or order_list[gi] == 1]
    G = len(kept)
    assert G == L

    if mxu_bf16 is None:
        mxu_bf16 = D >= 64           # bf16 MXU operands only pay off at real widths
    wdtype = jnp.bfloat16 if mxu_bf16 else jnp.float32

    kept_idx = np.asarray(kept)
    glu_w = params["glu_w"][kept_idx]                                  # [G, D, D] (out,in)
    w1 = jnp.transpose(glu_w, (0, 2, 1)).astype(wdtype)                # x @ W^T
    w2 = jnp.transpose(params["glu2_w"][kept_idx], (0, 2, 1)).astype(wdtype)
    bias = params["glu_b"][kept_idx][:, None, :]                       # [G, 1, D]
    if pos:
        # glu(item + pos) == glu(item) + pos @ Wglu^T  -> fold pos into a per-t bias
        pos_emb = params["pos_embedding"][:T]                          # [T, D]
        bias_full = bias + jnp.einsum("ti,goi->gto", pos_emb, glu_w)   # [G, T, D]
    else:
        bias_full = jnp.broadcast_to(bias, (G, T, D))
    wq = params["q_w"][kept_idx][:, None, :]                           # [G, 1, D]

    # Compact per-row valid lengths instead of a dense lane-padded mask block.
    # TODO(synk): assumes the standard contiguous 0/1 prefix mask (session lengths);
    # an arbitrary non-prefix float mask would need the dense [BS,T,1] mask input.
    lens = jnp.round(jnp.sum(mask.astype(jnp.float32), axis=-1)).astype(jnp.int32)  # [B]
    BS = B * S
    len_rows = jnp.broadcast_to(lens[:, None], (B, S)).reshape(BS, 1)

    # Feed the layer stacks directly (reshape only merges leading dims -> no copy).
    item = sess_layer.reshape(L, BS, T, D)
    tarL = tar_layer.reshape(L, BS, D)

    bs_pad = ((BS + 7) // 8) * 8
    if bs_pad != BS:                 # rare path: pad rows instead of full-extent blocks
        p = bs_pad - BS
        item = jnp.pad(item, ((0, 0), (0, p), (0, 0), (0, 0)))
        tarL = jnp.pad(tarL, ((0, 0), (0, p), (0, 0)))
        len_rows = jnp.pad(len_rows, ((0, p), (0, 0)))

    bs_tile = _pick_bs_tile(bs_pad, T, D)
    grid = (bs_pad // bs_tile, G)    # row tiles outer (parallel), groups inner (reduction)

    out = pl.pallas_call(
        _mta_kernel,
        out_shape=jax.ShapeDtypeStruct((bs_pad, 1), jnp.float32),
        grid_spec=pltpu.PrefetchScalarGridSpec(
            num_scalar_prefetch=0,
            grid=grid,
            in_specs=[
                pl.BlockSpec((None, bs_tile, T, D), lambda i, g: (g, i, 0, 0)),  # sess_layer[g]
                pl.BlockSpec((None, bs_tile, D),    lambda i, g: (g, i, 0)),     # tar_layer[g]
                pl.BlockSpec((bs_tile, 1),          lambda i, g: (i, 0)),        # valid lengths
                pl.BlockSpec((G, D, D),             lambda i, g: (0, 0, 0)),     # glu W^T (resident)
                pl.BlockSpec((G, D, D),             lambda i, g: (0, 0, 0)),     # glu2 W^T (resident)
                pl.BlockSpec((G, T, D),             lambda i, g: (0, 0, 0)),     # bias (+ pos proj)
                pl.BlockSpec((G, 1, D),             lambda i, g: (0, 0, 0)),     # q weight
            ],
            out_specs=pl.BlockSpec((bs_tile, 1), lambda i, g: (i, 0)),
            scratch_shapes=[pltpu.VMEM((bs_tile, D), jnp.float32),   # sess accumulator
                            pltpu.VMEM((bs_tile, D), jnp.float32)],  # normalized group-0 target
        ),
        compiler_params=pltpu.CompilerParams(
            dimension_semantics=("parallel", "arbitrary"),
            vmem_limit_bytes=48 * 1024 * 1024),   # > 16/32 MiB scoped defaults, < v7x 64 MiB
    )(item, tarL, len_rows, w1, w2, bias_full, wq)

    return out[:BS].reshape(B, S)


# ----------------------- pure-JAX reference (for checking) -------------------
def reference_forward(params, sess_layer, tar_layer, mask, layer, order, pos=False):
    L, B, S, T, D = sess_layer.shape
    groups, order_list = _group_indices(layer, order)
    sess_list, tar_list = [], []
    for gi, idx in enumerate(groups):
        s_emb = _l2_normalize(jnp.sum(sess_layer[jnp.array(idx)], axis=0))
        t_emb = _l2_normalize(jnp.sum(tar_layer[jnp.array(idx)], axis=0))
        if gi > 0:
            t_emb = 0.5 * t_emb
        sess_list.append(s_emb)
        tar_list.append(t_emb)

    mask_f = mask.astype(jnp.float32)[:, None, :, None]          # [B,1,T,1]
    pos_emb = params["pos_embedding"][:T][None, None]            # [1,1,T,D]
    sess_total = None
    for gi in range(len(groups)):
        item = sess_list[gi]                                     # [B,S,T,D]
        tar = tar_list[gi]                                       # [B,S,D]
        glu_in = item + pos_emb if pos else item
        h = glu_in @ params["glu_w"][gi].T + params["glu_b"][gi]
        h2 = (item * tar[:, :, None, :]) @ params["glu2_w"][gi].T
        logits = jax.nn.sigmoid(h + h2) @ params["q_w"][gi][:, None]   # [B,S,T,1]
        beta = jax.nn.softmax(logits * mask_f, axis=-2)
        sess_emb = jnp.sum(item * beta, axis=-2)                 # [B,S,D]
        if gi == 0:
            sess_total = sess_emb
        elif order_list[gi] == 1:
            sess_total = sess_total + sess_emb
    sess_n = 10.0 * _l2_normalize(sess_total)
    tar_n = _l2_normalize(tar_list[0])
    return jnp.sum(sess_n * tar_n, axis=-1)                      # [B, S]


# --------------------------- deterministic params ----------------------------
def init_params(key, dim, order, n_pos=20):
    n_mod = 3 * order
    ks = jax.random.split(key, 5)
    bound = 1.0 / np.sqrt(dim)
    params = dict(
        pos_embedding=jax.random.normal(ks[0], (n_pos, dim), jnp.float32),
        glu_w=jax.random.uniform(ks[1], (n_mod, dim, dim), jnp.float32, -bound, bound),
        glu_b=jax.random.uniform(ks[2], (n_mod, dim), jnp.float32, -bound, bound),
        glu2_w=jax.random.uniform(ks[3], (n_mod, dim, dim), jnp.float32, -bound, bound),
        q_w=jax.random.uniform(ks[4], (n_mod, dim), jnp.float32, -bound, bound),
    )
    # TODO(synk): tar_score / w / glu_tar linears and the Dropout modules are created in
    # __init__ but never used in forward(), so they are intentionally not materialized.
    return params


if __name__ == "__main__":
    B, S, T = 2, 4, 8            # batch, select_num, seq_len
    layer = 1
    L = layer + 1
    base_key = jax.random.PRNGKey(0)

    def run_case(dim, order, use_pos, atol, rtol):
        kd = jax.random.fold_in(base_key, dim * 10 + order)
        k1, k2, kp = jax.random.split(kd, 3)
        sess_layer = jax.random.normal(k1, (L, B, S, T, dim), jnp.float32)
        tar_layer = jax.random.normal(k2, (L, B, S, dim), jnp.float32)
        lengths = jnp.array([5, 8])
        mask = (jnp.arange(T)[None, :] < lengths[:, None]).astype(jnp.float32)  # [B, T]
        params = init_params(kp, dim, order)
        out = multigrain_target_attention(params, sess_layer, tar_layer, mask,
                                          layer, order, pos=use_pos)
        out = jax.block_until_ready(out)
        ref = reference_forward(params, sess_layer, tar_layer, mask,
                                layer, order, pos=use_pos)
        assert out.shape == (B, S)
        np.testing.assert_allclose(np.asarray(out), np.asarray(ref),
                                   rtol=rtol, atol=atol)

    # f32-MXU path (D < 64): tight parity with the f32 reference.
    # order=1: both groups kept; order=2: the order-2 group is statically filtered out,
    # matching the module (it computes it and then discards it).
    for order in (1, 2):
        for use_pos in (False, True):
            run_case(32, order, use_pos, atol=1e-4, rtol=1e-4)

    # bf16-MXU path (D >= 64): bf16 matmul operands, f32 accumulation/softmax/normalize.
    run_case(128, 1, False, atol=3e-2, rtol=3e-2)

    print("KERNEL_OK")
</pallas_src>

<mosaic_0001>
module attributes {stable_mosaic.version = 11 : i64} {
  func.func @_mta_kernel(%arg0: i32, %arg1: i32, %arg2: memref<1x8x8x32xf32, #tpu.memory_space<vmem>>, %arg3: memref<1x8x32xf32, #tpu.memory_space<vmem>>, %arg4: memref<8x1xi32, #tpu.memory_space<vmem>>, %arg5: memref<2x32x32xf32, #tpu.memory_space<vmem>>, %arg6: memref<2x32x32xf32, #tpu.memory_space<vmem>>, %arg7: memref<2x8x32xf32, #tpu.memory_space<vmem>>, %arg8: memref<2x1x32xf32, #tpu.memory_space<vmem>>, %arg9: memref<8x1xf32, #tpu.memory_space<vmem>>, %arg10: memref<8x32xf32, #tpu.memory_space<vmem>>, %arg11: memref<8x32xf32, #tpu.memory_space<vmem>>) attributes {dimension_semantics = [#tpu.dimension_semantics<parallel>, #tpu.dimension_semantics<arbitrary>], iteration_bounds = array<i64: 1, 2>, scalar_prefetch = 0 : i64, scratch_operands = 2 : i64, tpu.core_type = #tpu.core_type<tc>, window_params = [{transform_indices = @transform_0, window_bounds = array<i64: 1, 8, 8, 32>}, {transform_indices = @transform_1, window_bounds = array<i64: 1, 8, 32>}, {transform_indices = @transform_2, window_bounds = array<i64: 8, 1>}, {pipeline_mode = #tpu.pipeline_mode<synchronous>, transform_indices = @transform_3, window_bounds = array<i64: 2, 32, 32>}, {pipeline_mode = #tpu.pipeline_mode<synchronous>, transform_indices = @transform_4, window_bounds = array<i64: 2, 32, 32>}, {pipeline_mode = #tpu.pipeline_mode<synchronous>, transform_indices = @transform_5, window_bounds = array<i64: 2, 8, 32>}, {pipeline_mode = #tpu.pipeline_mode<synchronous>, transform_indices = @transform_6, window_bounds = array<i64: 2, 1, 32>}, {transform_indices = @transform_7, window_bounds = array<i64: 8, 1>}]} {
    %c0_i32 = arith.constant 0 : i32
    %0 = arith.cmpi eq, %arg1, %c0_i32 : i32
    %1 = arith.extui %0 : i1 to i32
    %c0_i32_0 = arith.constant 0 : i32
    %2 = arith.cmpi ne, %1, %c0_i32_0 : i32
    scf.if %2 {
      %cst_37 = arith.constant 0.000000e+00 : f32
      %91 = vector.broadcast %cst_37 : f32 to vector<8x32xf32>
      %c0_38 = arith.constant 0 : index
      %c0_39 = arith.constant 0 : index
      %92 = vector.load %arg10[%c0_38, %c0_39] : memref<8x32xf32, #tpu.memory_space<vmem>>, vector<8x32xf32>
      tpu.vector_store %arg10[%c0_38, %c0_39], %91 {strides = array<i32>} : memref<8x32xf32, #tpu.memory_space<vmem>>, vector<8x32xf32>,
    } else {
    }
    %c0 = arith.constant 0 : index
    %c0_1 = arith.constant 0 : index
    %c0_2 = arith.constant 0 : index
    %c0_3 = arith.constant 0 : index
    %3 = vector.load %arg2[%c0, %c0_1, %c0_2, %c0_3] : memref<1x8x8x32xf32, #tpu.memory_space<vmem>>, vector<1x8x8x32xf32>
    %4 = vector.shape_cast %3 : vector<1x8x8x32xf32> to vector<8x8x32xf32>
    %5 = arith.mulf %4, %4 : vector<8x8x32xf32>
    %cst = arith.constant dense<0.000000e+00> : vector<8x8xf32>
    %6 = vector.multi_reduction <add>, %5, %cst [2] : vector<8x8x32xf32> to vector<8x8xf32>
    %7 = vector.shape_cast %6 : vector<8x8xf32> to vector<8x8x1xf32>
    %cst_4 = arith.constant 1.000000e-24 : f32
    %8 = vector.broadcast %cst_4 : f32 to vector<8x8x1xf32>
    %9 = arith.maximumf %7, %8 : vector<8x8x1xf32>
    %10 = math.rsqrt %9 : vector<8x8x1xf32>
    %11 = vector.broadcast %10 : vector<8x8x1xf32> to vector<8x8x32xf32>
    %12 = arith.mulf %4, %11 : vector<8x8x32xf32>
    %c0_5 = arith.constant 0 : index
    %c0_6 = arith.constant 0 : index
    %c0_7 = arith.constant 0 : index
    %13 = vector.load %arg3[%c0_5, %c0_6, %c0_7] : memref<1x8x32xf32, #tpu.memory_space<vmem>>, vector<1x8x32xf32>
    %14 = vector.shape_cast %13 : vector<1x8x32xf32> to vector<8x32xf32>
    %15 = arith.mulf %14, %14 : vector<8x32xf32>
    %cst_8 = arith.constant dense<0.000000e+00> : vector<8xf32>
    %16 = vector.multi_reduction <add>, %15, %cst_8 [1] : vector<8x32xf32> to vector<8xf32>
    %17 = vector.shape_cast %16 : vector<8xf32> to vector<8x1xf32>
    %cst_9 = arith.constant 1.000000e-24 : f32
    %18 = vector.broadcast %cst_9 : f32 to vector<8x1xf32>
    %19 = arith.maximumf %17, %18 : vector<8x1xf32>
    %20 = math.rsqrt %19 : vector<8x1xf32>
    %21 = vector.broadcast %20 : vector<8x1xf32> to vector<8x32xf32>
    %22 = arith.mulf %14, %21 : vector<8x32xf32>
    %c0_i32_10 = arith.constant 0 : i32
    %23 = arith.cmpi eq, %arg1, %c0_i32_10 : i32
    %24 = arith.extui %23 : i1 to i32
    %c0_i32_11 = arith.constant 0 : i32
    %25 = arith.cmpi ne, %24, %c0_i32_11 : i32
    scf.if %25 {
      %c0_37 = arith.constant 0 : index
      %c0_38 = arith.constant 0 : index
      %91 = vector.load %arg11[%c0_37, %c0_38] : memref<8x32xf32, #tpu.memory_space<vmem>>, vector<8x32xf32>
      tpu.vector_store %arg11[%c0_37, %c0_38], %22 {strides = array<i32>} : memref<8x32xf32, #tpu.memory_space<vmem>>, vector<8x32xf32>,
    } else {
    }
    %c0_i32_12 = arith.constant 0 : i32
    %26 = arith.cmpi eq, %arg1, %c0_i32_12 : i32
    %cst_13 = arith.constant 1.000000e+00 : f32
    %cst_14 = arith.constant 5.000000e-01 : f32
    %27 = arith.select %26, %cst_13, %cst_14 : f32
    %28 = vector.broadcast %27 : f32 to vector<8x32xf32>
    %29 = arith.mulf %22, %28 : vector<8x32xf32>
    %30 = vector.shape_cast %29 : vector<8x32xf32> to vector<8x1x32xf32>
    %31 = vector.shape_cast %12 : vector<8x8x32xf32> to vector<64x32xf32>
    %32 = vector.broadcast %30 : vector<8x1x32xf32> to vector<8x8x32xf32>
    %33 = arith.mulf %12, %32 : vector<8x8x32xf32>
    %34 = vector.shape_cast %33 : vector<8x8x32xf32> to vector<64x32xf32>
    %35 = arith.index_cast %arg1 : i32 to index
    %c0_15 = arith.constant 0 : index
    %c0_16 = arith.constant 0 : index
    %36 = vector.load %arg5[%35, %c0_15, %c0_16] : memref<2x32x32xf32, #tpu.memory_space<vmem>>, vector<1x32x32xf32>
    %37 = vector.shape_cast %36 : vector<1x32x32xf32> to vector<32x32xf32>
    %cst_17 = arith.constant dense<0.000000e+00> : vector<64x32xf32>
    %38 = tpu.matmul %31, %37, %cst_17 {dimension_numbers = #tpu.dot_dimension_numbers<[1], [0], [0], [1], [0, 0, 1, 1], [], []>} : vector<64x32xf32>, vector<32x32xf32>, vector<64x32xf32> -> vector<64x32xf32>
    %39 = arith.index_cast %arg1 : i32 to index
    %c0_18 = arith.constant 0 : index
    %c0_19 = arith.constant 0 : index
    %40 = vector.load %arg6[%39, %c0_18, %c0_19] : memref<2x32x32xf32, #tpu.memory_space<vmem>>, vector<1x32x32xf32>
    %41 = vector.shape_cast %40 : vector<1x32x32xf32> to vector<32x32xf32>
    %cst_20 = arith.constant dense<0.000000e+00> : vector<64x32xf32>
    %42 = tpu.matmul %34, %41, %cst_20 {dimension_numbers = #tpu.dot_dimension_numbers<[1], [0], [0], [1], [0, 0, 1, 1], [], []>} : vector<64x32xf32>, vector<32x32xf32>, vector<64x32xf32> -> vector<64x32xf32>
    %43 = arith.addf %38, %42 : vector<64x32xf32>
    %44 = vector.shape_cast %43 : vector<64x32xf32> to vector<8x8x32xf32>
    %45 = arith.index_cast %arg1 : i32 to index
    %c0_21 = arith.constant 0 : index
    %c0_22 = arith.constant 0 : index
    %46 = vector.load %arg7[%45, %c0_21, %c0_22] : memref<2x8x32xf32, #tpu.memory_space<vmem>>, vector<1x8x32xf32>
    %47 = vector.shape_cast %46 : vector<1x8x32xf32> to vector<8x32xf32>
    %48 = vector.shape_cast %47 : vector<8x32xf32> to vector<1x8x32xf32>
    %49 = vector.broadcast %48 : vector<1x8x32xf32> to vector<8x8x32xf32>
    %50 = arith.addf %44, %49 : vector<8x8x32xf32>
    %51 = arith.negf %50 : vector<8x8x32xf32>
    %52 = math.exp %51 : vector<8x8x32xf32>
    %cst_23 = arith.constant 1.000000e+00 : f32
    %53 = vector.broadcast %cst_23 : f32 to vector<8x8x32xf32>
    %54 = arith.addf %53, %52 : vector<8x8x32xf32>
    %55 = arith.divf %53, %54 : vector<8x8x32xf32>
    %56 = arith.index_cast %arg1 : i32 to index
    %c0_24 = arith.constant 0 : index
    %c0_25 = arith.constant 0 : index
    %57 = vector.load %arg8[%56, %c0_24, %c0_25] : memref<2x1x32xf32, #tpu.memory_space<vmem>>, vector<1x1x32xf32>
    %58 = vector.shape_cast %57 : vector<1x1x32xf32> to vector<1x32xf32>
    %59 = vector.shape_cast %58 : vector<1x32xf32> to vector<1x1x32xf32>
    %60 = vector.broadcast %59 : vector<1x1x32xf32> to vector<8x8x32xf32>
    %61 = arith.mulf %55, %60 : vector<8x8x32xf32>
    %cst_26 = arith.constant dense<0.000000e+00> : vector<8x8xf32>
    %62 = vector.multi_reduction <add>, %61, %cst_26 [2] : vector<8x8x32xf32> to vector<8x8xf32>
    %63 = vector.shape_cast %62 : vector<8x8xf32> to vector<8x8x1xf32>
    %64 = tpu.iota {dimensions = array<i32: 1>} : vector<8x8x1xi32>
    %c0_27 = arith.constant 0 : index
    %c0_28 = arith.constant 0 : index
    %65 = vector.load %arg4[%c0_27, %c0_28] : memref<8x1xi32, #tpu.memory_space<vmem>>, vector<8x1xi32>
    %66 = vector.shape_cast %65 : vector<8x1xi32> to vector<8x1x1xi32>
    %67 = vector.broadcast %66 : vector<8x1x1xi32> to vector<8x8x1xi32>
    %68 = arith.cmpi slt, %64, %67 : vector<8x8x1xi32>
    %69 = arith.extui %68 : vector<8x8x1xi1> to vector<8x8x1xi32>
    %70 = arith.sitofp %69 : vector<8x8x1xi32> to vector<8x8x1xf32>
    %71 = arith.mulf %63, %70 : vector<8x8x1xf32>
    %cst_29 = arith.constant dense<0xFF800000> : vector<8x1xf32>
    %72 = vector.multi_reduction <maximumf>, %71, %cst_29 [1] : vector<8x8x1xf32> to vector<8x1xf32>
    %73 = vector.shape_cast %72 : vector<8x1xf32> to vector<8x1x1xf32>
    %74 = vector.broadcast %73 : vector<8x1x1xf32> to vector<8x8x1xf32>
    %75 = arith.subf %71, %74 : vector<8x8x1xf32>
    %76 = math.exp %75 : vector<8x8x1xf32>
    %cst_30 = arith.constant dense<0.000000e+00> : vector<8x1xf32>
    %77 = vector.multi_reduction <add>, %76, %cst_30 [1] : vector<8x8x1xf32> to vector<8x1xf32>
    %78 = vector.shape_cast %77 : vector<8x1xf32> to vector<8x1x1xf32>
    %79 = tpu.reciprocal %78 : vector<8x1x1xf32> -> vector<8x1x1xf32>
    %80 = vector.broadcast %79 : vector<8x1x1xf32> to vector<8x8x1xf32>
    %81 = arith.mulf %76, %80 : vector<8x8x1xf32>
    %c0_31 = arith.constant 0 : index
    %c0_32 = arith.constant 0 : index
    %82 = vector.load %arg10[%c0_31, %c0_32] : memref<8x32xf32, #tpu.memory_space<vmem>>, vector<8x32xf32>
    %83 = vector.broadcast %81 : vector<8x8x1xf32> to vector<8x8x32xf32>
    %84 = arith.mulf %12, %83 : vector<8x8x32xf32>
    %cst_33 = arith.constant dense<0.000000e+00> : vector<8x32xf32>
    %85 = vector.multi_reduction <add>, %84, %cst_33 [1] : vector<8x8x32xf32> to vector<8x32xf32>
    %86 = arith.addf %82, %85 : vector<8x32xf32>
    %c0_34 = arith.constant 0 : index
    %c0_35 = arith.constant 0 : index
    %87 = vector.load %arg10[%c0_34, %c0_35] : memref<8x32xf32, #tpu.memory_space<vmem>>, vector<8x32xf32>
    tpu.vector_store %arg10[%c0_34, %c0_35], %86 {strides = array<i32>} : memref<8x32xf32, #tpu.memory_space<vmem>>, vector<8x32xf32>,
    %c1_i32 = arith.constant 1 : i32
    %88 = arith.cmpi eq, %arg1, %c1_i32 : i32
    %89 = arith.extui %88 : i1 to i32
    %c0_i32_36 = arith.constant 0 : i32
    %90 = arith.cmpi ne, %89, %c0_i32_36 : i32
    scf.if %90 {
      %c0_37 = arith.constant 0 : index
      %c0_38 = arith.constant 0 : index
      %91 = vector.load %arg10[%c0_37, %c0_38] : memref<8x32xf32, #tpu.memory_space<vmem>>, vector<8x32xf32>
      %92 = arith.mulf %91, %91 : vector<8x32xf32>
      %cst_39 = arith.constant dense<0.000000e+00> : vector<8xf32>
      %93 = vector.multi_reduction <add>, %92, %cst_39 [1] : vector<8x32xf32> to vector<8xf32>
      %94 = vector.shape_cast %93 : vector<8xf32> to vector<8x1xf32>
      %cst_40 = arith.constant 1.000000e-24 : f32
      %95 = vector.broadcast %cst_40 : f32 to vector<8x1xf32>
      %96 = arith.maximumf %94, %95 : vector<8x1xf32>
      %97 = math.rsqrt %96 : vector<8x1xf32>
      %98 = vector.broadcast %97 : vector<8x1xf32> to vector<8x32xf32>
      %99 = arith.mulf %91, %98 : vector<8x32xf32>
      %cst_41 = arith.constant 1.000000e+01 : f32
      %100 = vector.broadcast %cst_41 : f32 to vector<8x32xf32>
      %101 = arith.mulf %100, %99 : vector<8x32xf32>
      %c0_42 = arith.constant 0 : index
      %c0_43 = arith.constant 0 : index
      %102 = vector.load %arg11[%c0_42, %c0_43] : memref<8x32xf32, #tpu.memory_space<vmem>>, vector<8x32xf32>
      %103 = arith.mulf %101, %102 : vector<8x32xf32>
      %cst_44 = arith.constant dense<0.000000e+00> : vector<8xf32>
      %104 = vector.multi_reduction <add>, %103, %cst_44 [1] : vector<8x32xf32> to vector<8xf32>
      %105 = vector.shape_cast %104 : vector<8xf32> to vector<8x1xf32>
      %c0_45 = arith.constant 0 : index
      %c0_46 = arith.constant 0 : index
      %106 = vector.load %arg9[%c0_45, %c0_46] : memref<8x1xf32, #tpu.memory_space<vmem>>, vector<8x1xf32>
      tpu.vector_store %arg9[%c0_45, %c0_46], %105 {strides = array<i32>} : memref<8x1xf32, #tpu.memory_space<vmem>>, vector<8x1xf32>,
    } else {
    }
    return
  }
  func.func @transform_0(%arg0: i32, %arg1: i32) -> (i32, i32, i32, i32) {
    %c0_i32 = arith.constant 0 : i32
    %c0_i32_0 = arith.constant 0 : i32
    %c0_i32_1 = arith.constant 0 : i32
    return %arg1, %arg0, %c0_i32, %c0_i32_0 : i32, i32, i32, i32
  }
  func.func @transform_1(%arg0: i32, %arg1: i32) -> (i32, i32, i32) {
    %c0_i32 = arith.constant 0 : i32
    %c0_i32_0 = arith.constant 0 : i32
    return %arg1, %arg0, %c0_i32 : i32, i32, i32
  }
  func.func @transform_2(%arg0: i32, %arg1: i32) -> (i32, i32) {
    %c0_i32 = arith.constant 0 : i32
    %c0_i32_0 = arith.constant 0 : i32
    return %arg0, %c0_i32 : i32, i32
  }
  func.func @transform_3(%arg0: i32, %arg1: i32) -> (i32, i32, i32) {
    %c0_i32 = arith.constant 0 : i32
    %c0_i32_0 = arith.constant 0 : i32
    %c0_i32_1 = arith.constant 0 : i32
    %c0_i32_2 = arith.constant 0 : i32
    return %c0_i32, %c0_i32_0, %c0_i32_1 : i32, i32, i32
  }
  func.func @transform_4(%arg0: i32, %arg1: i32) -> (i32, i32, i32) {
    %c0_i32 = arith.constant 0 : i32
    %c0_i32_0 = arith.constant 0 : i32
    %c0_i32_1 = arith.constant 0 : i32
    %c0_i32_2 = arith.constant 0 : i32
    return %c0_i32, %c0_i32_0, %c0_i32_1 : i32, i32, i32
  }
  func.func @transform_5(%arg0: i32, %arg1: i32) -> (i32, i32, i32) {
    %c0_i32 = arith.constant 0 : i32
    %c0_i32_0 = arith.constant 0 : i32
    %c0_i32_1 = arith.constant 0 : i32
    %c0_i32_2 = arith.constant 0 : i32
    return %c0_i32, %c0_i32_0, %c0_i32_1 : i32, i32, i32
  }
  func.func @transform_6(%arg0: i32, %arg1: i32) -> (i32, i32, i32) {
    %c0_i32 = arith.constant 0 : i32
    %c0_i32_0 = arith.constant 0 : i32
    %c0_i32_1 = arith.constant 0 : i32
    %c0_i32_2 = arith.constant 0 : i32
    return %c0_i32, %c0_i32_0, %c0_i32_1 : i32, i32, i32
  }
  func.func @transform_7(%arg0: i32, %arg1: i32) -> (i32, i32) {
    %c0_i32 = arith.constant 0 : i32
    %c0_i32_0 = arith.constant 0 : i32
    return %arg0, %c0_i32 : i32, i32
  }
}

</mosaic_0001>

<llo_original>
// kernel: tpu_custom_call.1
$region0: #{tpu_custom_call.1}
  #allocation0 [shape = 'u32[]', space=smem, size = 0x4, offset = 0x4, fixed_abs, tag = 'smem constant byte address 0x4 - core index']
  #allocation1 [shape = 'u32[144,128]{1,0:T(1,128)}', space=vmem, size = 0x12000, scoped, tag = 'internal scratch']
  #allocation2 [shape = 'f32[8,32]{1,0:T(8,128)}', space=vmem, size = 0x1000, scoped, tag = 'scratch operand']
  #allocation3 [shape = 'f32[8,32]{1,0:T(8,128)}', space=vmem, size = 0x1000, scoped, tag = 'scratch operand']
  %s0 = inlined_call_operand.hbm [shape: f32[2,8,8,32], index: 0, kind: input, shape index: {}]
  %s1 = inlined_call_operand.hbm [shape: f32[2,8,32], index: 1, kind: input, shape index: {}]
  %s2 = inlined_call_operand.vmem [shape: s32[8,1], index: 2, kind: input, shape index: {}]
  %s3 = inlined_call_operand.hbm [shape: f32[2,32,32], index: 3, kind: input, shape index: {}]
  %s4 = inlined_call_operand.hbm [shape: f32[2,32,32], index: 4, kind: input, shape index: {}]
  %s5 = inlined_call_operand.vmem [shape: f32[2,8,32], index: 5, kind: input, shape index: {}]
  %s6 = inlined_call_operand.vmem [shape: f32[2,1,32], index: 6, kind: input, shape index: {}]
  %s7 = inlined_call_operand.vmem [shape: f32[8,1], index: 7, kind: output, shape index: {}]
  %s8 = sld [smem:[#allocation0]]
  $region89: #{tpu_custom_call.1} parent=0
    _
  %s10 = ssub.s32 1, %s8
  %s11 = scalar_select 0, %s10, %s8
  $region1: #{tpu_custom_call.1} parent=0
    #allocation4 [shape = 'u8[65536]{0}', space=vmem, size = 0x10000, scoped, tag = 'input window, operand 0']
    #allocation5 [shape = 's32[2]{0}', space=sflag, size = 0x8, scoped, tag = 'scoped memory for tpu_custom_call.1']
    #allocation6 [shape = 'u8[8192]{0}', space=vmem, size = 0x2000, scoped, tag = 'input window, operand 1']
    #allocation7 [shape = 's32[2]{0}', space=sflag, size = 0x8, scoped, tag = 'scoped memory for tpu_custom_call.1']
    #allocation8 [shape = 'u8[32768]{0}', space=vmem, size = 0x8000, scoped, tag = 'input window, operand 3, single buffered']
    #allocation9 [shape = 'u8[32768]{0}', space=vmem, size = 0x8000, scoped, tag = 'input window, operand 4, single buffered']
    #allocation10 [shape = 's32[1]{0}', space=sflag, size = 0x4, scoped, tag = 'scoped memory for tpu_custom_call.1']
    %12 = vsyncpa [#allocation5], 0
    %s13 = scalar_lea.sflag [#allocation5], 1
    %14 = vsyncpa %s13, 0
    %15 = vsyncpa [#allocation7], 0
    %s16 = scalar_lea.sflag [#allocation7], 1
    %17 = vsyncpa %s16, 0
    %18 = vsyncpa [#allocation10], 0
    loop: start=0, step=1, limit=4
    $region2: #{tpu_custom_call.1} parent=1 // loop_pre_header
      _
    $region3: #{tpu_custom_call.1} parent=1 // loop_header
      %s20 = sphi 0, %s24
      %p21 = scmp.ge.s32.totalorder %s20, 4
      %s27 = sphi 0, %s39
      %s28 = sphi 0, %s35
      %s29 = sphi 0, %s27
      %s30 = sphi 0, %s28
      %s31 = sphi 0, %s29
      %s32 = sphi 0, %s30
      %s44 = sphi 0, %s46
      %s47 = sphi 0, %s44
      %s48 = sphi 0, %s47
      %s64 = sphi 0, %s48
      %s72 = sphi 0, %s74
      %s75 = sphi 0, %s72
      %s76 = sphi 0, %s75
      %s92 = sphi 0, %s76
      %s98 = sphi 0, %s100
      %s101 = sphi 0, %s98
      %s102 = sphi 0, %s101
      %s118 = sphi 0, %s102
      %s122 = sphi 0, %s122
      %s124 = sphi 0, %s122
      %s125 = sphi 0, %s124
      %s139 = sphi 0, %s125
      %s143 = sphi 0, %s143
      %s145 = sphi 0, %s143
      %s146 = sphi 0, %s145
      %s160 = sphi 0, %s146
      %s164 = sphi 0, %s164
      %s166 = sphi 0, %s164
      %s167 = sphi 0, %s166
      %s181 = sphi 0, %s167
      %s185 = sphi 0, %s185
      %s187 = sphi 0, %s185
      %s188 = sphi 0, %s187
      %s202 = sphi 0, %s188
      %s208 = sphi 0, %s210
      %s211 = sphi 0, %s208
      %s212 = sphi 0, %s211
      %s228 = sphi 0, %s212
    $region4: #{tpu_custom_call.1} parent=1 // loop_header_branch
      %23 = sbr.rel (%p21) target = $region8
    $region5: #{tpu_custom_call.1} parent=1 // loop_body
      %s25 = ssub.s32 %s20, 1
      %s26 = ssub.s32 %s20, 2
      %s33 = sadd.s32 1, %s28
      %p34 = scmp.ge.s32.totalorder %s33, 2
      %s35 = scalar_select %p34, 0, %s33
      %s36 = sadd.s32 1, %s27
      %s37 = scalar_select %p34, %s36, %s27
      %p38 = scmp.ge.s32.totalorder %s37, 1
      %s39 = scalar_select %p38, 0, %s37
      %s40 = ssub.s32 %s28, %s35
      %s41 = ssub.s32 %s27, %s39
      %s42 = sor.u32 %s40, %s41
      %p43 = scmp.eq.s32.totalorder %s42, 0
      %s45 = sadd.s32 %s44, 1
      %s46 = scalar_select %p43, %s44, %s45
      %p49 = pneg %p43
      %p50 = scmp.eq.s32.totalorder %s20, 1
      %p51 = por %p49, %p50
      %p52 = scmp.ne.s32.totalorder %s44, %s47
      %p53 = scmp.eq.s32.totalorder %s20, 0
      %p54 = por %p52, %p53
      %p55 = scmp.ne.s32.totalorder %s44, %s47
      %p56 = scmp.eq.s32.totalorder %s25, 1
      %p57 = por %p55, %p56
      %p58 = scmp.ne.s32.totalorder %s47, %s48
      %p59 = scmp.eq.s32.totalorder %s25, 0
      %p60 = por %p58, %p59
      %p61 = scmp.ne.s32.totalorder %s47, %s48
      %p62 = scmp.eq.s32.totalorder %s26, 1
      %p63 = por %p61, %p62
      %p65 = scmp.ne.s32.totalorder %s48, %s64
      %p66 = scmp.eq.s32.totalorder %s26, 0
      %p67 = por %p65, %p66
      %s68 = ssub.s32 %s28, %s35
      %s69 = ssub.s32 %s27, %s39
      %s70 = sor.u32 %s68, %s69
      %p71 = scmp.eq.s32.totalorder %s70, 0
      %s73 = sadd.s32 %s72, 1
      %s74 = scalar_select %p71, %s72, %s73
      %p77 = pneg %p71
      %p78 = scmp.eq.s32.totalorder %s20, 1
      %p79 = por %p77, %p78
      %p80 = scmp.ne.s32.totalorder %s72, %s75
      %p81 = scmp.eq.s32.totalorder %s20, 0
      %p82 = por %p80, %p81
      %p83 = scmp.ne.s32.totalorder %s72, %s75
      %p84 = scmp.eq.s32.totalorder %s25, 1
      %p85 = por %p83, %p84
      %p86 = scmp.ne.s32.totalorder %s75, %s76
      %p87 = scmp.eq.s32.totalorder %s25, 0
      %p88 = por %p86, %p87
      %p89 = scmp.ne.s32.totalorder %s75, %s76
      %p90 = scmp.eq.s32.totalorder %s26, 1
      %p91 = por %p89, %p90
      %p93 = scmp.ne.s32.totalorder %s76, %s92
      %p94 = scmp.eq.s32.totalorder %s26, 0
      %p95 = por %p93, %p94
      %s96 = ssub.s32 %s27, %s39
      %p97 = scmp.eq.s32.totalorder %s96, 0
      %s99 = sadd.s32 %s98, 1
      %s100 = scalar_select %p97, %s98, %s99
      %p103 = pneg %p97
      %p104 = scmp.eq.s32.totalorder %s20, 1
      %p105 = por %p103, %p104
      %p106 = scmp.ne.s32.totalorder %s98, %s101
      %p107 = scmp.eq.s32.totalorder %s20, 0
      %p108 = por %p106, %p107
      %p109 = scmp.ne.s32.totalorder %s98, %s101
      %p110 = scmp.eq.s32.totalorder %s25, 1
      %p111 = por %p109, %p110
      %p112 = scmp.ne.s32.totalorder %s101, %s102
      %p113 = scmp.eq.s32.totalorder %s25, 0
      %p114 = por %p112, %p113
      %p115 = scmp.ne.s32.totalorder %s101, %s102
      %p116 = scmp.eq.s32.totalorder %s26, 1
      %p117 = por %p115, %p116
      %p119 = scmp.ne.s32.totalorder %s102, %s118
      %p120 = scmp.eq.s32.totalorder %s26, 0
      %p121 = por %p119, %p120
      %s123 = sadd.s32 %s122, 1
      %p126 = scmp.eq.s32.totalorder %s20, 1
      %p127 = scmp.ne.s32.totalorder %s122, %s124
      %p128 = scmp.eq.s32.totalorder %s20, 0
      %p129 = por %p127, %p128
      %p130 = scmp.ne.s32.totalorder %s122, %s124
      %p131 = scmp.eq.s32.totalorder %s25, 1
      %p132 = por %p130, %p131
      %p133 = scmp.ne.s32.totalorder %s124, %s125
      %p134 = scmp.eq.s32.totalorder %s25, 0
      %p135 = por %p133, %p134
      %p136 = scmp.ne.s32.totalorder %s124, %s125
      %p137 = scmp.eq.s32.totalorder %s26, 1
      %p138 = por %p136, %p137
      %p140 = scmp.ne.s32.totalorder %s125, %s139
      %p141 = scmp.eq.s32.totalorder %s26, 0
      %p142 = por %p140, %p141
      %s144 = sadd.s32 %s143, 1
      %p147 = scmp.eq.s32.totalorder %s20, 1
      %p148 = scmp.ne.s32.totalorder %s143, %s145
      %p149 = scmp.eq.s32.totalorder %s20, 0
      %p150 = por %p148, %p149
      %p151 = scmp.ne.s32.totalorder %s143, %s145
      %p152 = scmp.eq.s32.totalorder %s25, 1
      %p153 = por %p151, %p152
      %p154 = scmp.ne.s32.totalorder %s145, %s146
      %p155 = scmp.eq.s32.totalorder %s25, 0
      %p156 = por %p154, %p155
      %p157 = scmp.ne.s32.totalorder %s145, %s146
      %p158 = scmp.eq.s32.totalorder %s26, 1
      %p159 = por %p157, %p158
      %p161 = scmp.ne.s32.totalorder %s146, %s160
      %p162 = scmp.eq.s32.totalorder %s26, 0
      %p163 = por %p161, %p162
      %s165 = sadd.s32 %s164, 1
      %p168 = scmp.eq.s32.totalorder %s20, 1
      %p169 = scmp.ne.s32.totalorder %s164, %s166
      %p170 = scmp.eq.s32.totalorder %s20, 0
      %p171 = por %p169, %p170
      %p172 = scmp.ne.s32.totalorder %s164, %s166
      %p173 = scmp.eq.s32.totalorder %s25, 1
      %p174 = por %p172, %p173
      %p175 = scmp.ne.s32.totalorder %s166, %s167
      %p176 = scmp.eq.s32.totalorder %s25, 0
      %p177 = por %p175, %p176
      %p178 = scmp.ne.s32.totalorder %s166, %s167
      %p179 = scmp.eq.s32.totalorder %s26, 1
      %p180 = por %p178, %p179
      %p182 = scmp.ne.s32.totalorder %s167, %s181
      %p183 = scmp.eq.s32.totalorder %s26, 0
      %p184 = por %p182, %p183
      %s186 = sadd.s32 %s185, 1
      %p189 = scmp.eq.s32.totalorder %s20, 1
      %p190 = scmp.ne.s32.totalorder %s185, %s187
      %p191 = scmp.eq.s32.totalorder %s20, 0
      %p192 = por %p190, %p191
      %p193 = scmp.ne.s32.totalorder %s185, %s187
      %p194 = scmp.eq.s32.totalorder %s25, 1
      %p195 = por %p193, %p194
      %p196 = scmp.ne.s32.totalorder %s187, %s188
      %p197 = scmp.eq.s32.totalorder %s25, 0
      %p198 = por %p196, %p197
      %p199 = scmp.ne.s32.totalorder %s187, %s188
      %p200 = scmp.eq.s32.totalorder %s26, 1
      %p201 = por %p199, %p200
      %p203 = scmp.ne.s32.totalorder %s188, %s202
      %p204 = scmp.eq.s32.totalorder %s26, 0
      %p205 = por %p203, %p204
      %s206 = ssub.s32 %s27, %s39
      %p207 = scmp.eq.s32.totalorder %s206, 0
      %s209 = sadd.s32 %s208, 1
      %s210 = scalar_select %p207, %s208, %s209
      %p213 = pneg %p207
      %p214 = scmp.eq.s32.totalorder %s20, 1
      %p215 = por %p213, %p214
      %p216 = scmp.ne.s32.totalorder %s208, %s211
      %p217 = scmp.eq.s32.totalorder %s20, 0
      %p218 = por %p216, %p217
      %p219 = scmp.ne.s32.totalorder %s208, %s211
      %p220 = scmp.eq.s32.totalorder %s25, 1
      %p221 = por %p219, %p220
      %p222 = scmp.ne.s32.totalorder %s211, %s212
      %p223 = scmp.eq.s32.totalorder %s25, 0
      %p224 = por %p222, %p223
      %p225 = scmp.ne.s32.totalorder %s211, %s212
      %p226 = scmp.eq.s32.totalorder %s26, 1
      %p227 = por %p225, %p226
      %p229 = scmp.ne.s32.totalorder %s212, %s228
      %p230 = scmp.eq.s32.totalorder %s26, 0
      %p231 = por %p229, %p230
      %p232 = scmp.le.s32.totalorder 1, %s20
      %p233 = scmp.lt.s32.totalorder %s20, 3
      %p234 = pnand %p232, %p233
      %p235 = pneg %p234
      // Predicated region
      $region9: #{tpu_custom_call.1} parent=5 // pred_check
        _
      $region10: #{tpu_custom_call.1} parent=5 // pred_check_branch
        %237 = sbr.rel (%p234) target = $region12
      $region11: #{tpu_custom_call.1} parent=5 // pred_region
        %s238 = ssub.s32 %s20, 1
        // Predicated region
        $region13: #{tpu_custom_call.1} parent=11 // pred_check
          %p239 = pneg %p114
        $region14: #{tpu_custom_call.1} parent=11 // pred_check_branch
          %241 = sbr.rel (%p239) target = $region16
        $region15: #{tpu_custom_call.1} parent=11 // pred_region
          %p242 = scmp.lt.s32.totalorder %s29, 0
          %s243 = scalar_select %p242, %s29, 0
          %s244 = smul.addr %s243, 8
          %s245 = scalar_lea.vmem %s2, %s244
        $region16: #{tpu_custom_call.1} parent=11 // pred_fallthru
          _
        // Predicated region
        $region17: #{tpu_custom_call.1} parent=11 // pred_check
          %p246 = pneg %p135
        $region18: #{tpu_custom_call.1} parent=11 // pred_check_branch
          %248 = sbr.rel (%p246) target = $region20
        $region19: #{tpu_custom_call.1} parent=11 // pred_region
          %s250 = ssub.s32 1024, 1024
          %251 = vsyncadd [#allocation7], %s250
          %s252 = sshll.u32 [#allocation8], 4
          %s253 = int_to_ptr.vmem [resolvable:$true] %s252
          %258 = dma.hbm_to_vmem [thread:$0]  %s3, 1024, %s253, [#allocation7], 128, 128, 8
        $region20: #{tpu_custom_call.1} parent=11 // pred_fallthru
          _
        // Predicated region
        $region21: #{tpu_custom_call.1} parent=11 // pred_check
          %p259 = pneg %p156
        $region22: #{tpu_custom_call.1} parent=11 // pred_check_branch
          %261 = sbr.rel (%p259) target = $region24
        $region23: #{tpu_custom_call.1} parent=11 // pred_region
          %s263 = ssub.s32 1024, 1024
          %264 = vsyncadd [#allocation10], %s263
          %s265 = sshll.u32 [#allocation9], 4
          %s266 = int_to_ptr.vmem [resolvable:$true] %s265
          %271 = dma.hbm_to_vmem [thread:$0]  %s4, 1024, %s266, [#allocation10], 128, 128, 8
        $region24: #{tpu_custom_call.1} parent=11 // pred_fallthru
          _
        // Predicated region
        $region25: #{tpu_custom_call.1} parent=11 // pred_check
          %p272 = pneg %p177
        $region26: #{tpu_custom_call.1} parent=11 // pred_check_branch
          %274 = sbr.rel (%p272) target = $region28
        $region27: #{tpu_custom_call.1} parent=11 // pred_region
          _
        $region28: #{tpu_custom_call.1} parent=11 // pred_fallthru
          _
        // Predicated region
        $region29: #{tpu_custom_call.1} parent=11 // pred_check
          %p275 = pneg %p198
        $region30: #{tpu_custom_call.1} parent=11 // pred_check_branch
          %277 = sbr.rel (%p275) target = $region32
        $region31: #{tpu_custom_call.1} parent=11 // pred_region
          _
        $region32: #{tpu_custom_call.1} parent=11 // pred_fallthru
          _
      $region12: #{tpu_custom_call.1} parent=5 // pred_fallthru
        _
      %p278 = scmp.lt.s32.totalorder %s20, 2
      // Predicated region
      $region33: #{tpu_custom_call.1} parent=5 // pred_check
        %p279 = pneg %p278
      $region34: #{tpu_custom_call.1} parent=5 // pred_check_branch
        %281 = sbr.rel (%p279) target = $region36
      $region35: #{tpu_custom_call.1} parent=5 // pred_region
        // Predicated region
        $region37: #{tpu_custom_call.1} parent=35 // pred_check
          %p282 = pneg %p54
        $region38: #{tpu_custom_call.1} parent=35 // pred_check_branch
          %284 = sbr.rel (%p282) target = $region40
        $region39: #{tpu_custom_call.1} parent=35 // pred_region
          %s285 = sand.u32 %s44, 1
          %s286 = scalar_lea.sflag [#allocation5], %s285
          %s287 = sand.u32 %s44, 1
          %s288 = smul.addr %s287, 64
          %s289 = scalar_lea.vmem [#allocation4], %s288
          %s290 = smul.u32 8, %s27
          %s292 = ssub.s32 1024, 1024
          %293 = vsyncadd %s286, %s292
          %s294 = smul.addr %s28, 8
          %s295 = sadd.s32 %s290, %s294
          %s296 = smul.addr %s295, 128
          %s297 = scalar_lea.hbm %s0, %s296
          %s298 = sshll.u32 %s289, 4
          %s299 = int_to_ptr.vmem [resolvable:$true] %s298
          %304 = dma.hbm_to_vmem [thread:$0]  %s297, 1024, %s299, %s286, 128, 128, 8
        $region40: #{tpu_custom_call.1} parent=35 // pred_fallthru
          _
        // Predicated region
        $region41: #{tpu_custom_call.1} parent=35 // pred_check
          %p305 = pneg %p82
        $region42: #{tpu_custom_call.1} parent=35 // pred_check_branch
          %307 = sbr.rel (%p305) target = $region44
        $region43: #{tpu_custom_call.1} parent=35 // pred_region
          %s308 = sand.u32 %s20, 1
          %s309 = scalar_lea.sflag [#allocation7], %s308
          %s310 = sand.u32 %s72, 1
          %s311 = smul.addr %s310, 8
          %s312 = scalar_lea.vmem [#allocation6], %s311
          %s314 = ssub.s32 128, 128
          %315 = vsyncadd %s309, %s314
          %s316 = sadd.s32 %s27, %s28
          %s317 = smul.addr %s316, 128
          %s318 = scalar_lea.hbm %s1, %s317
          %s320 = sshll.u32 %s312, 4
          %s321 = int_to_ptr.vmem [resolvable:$true] %s320
          %323 = dma.hbm_to_vmem [thread:$0]  %s318, 128, %s321, %s309
        $region44: #{tpu_custom_call.1} parent=35 // pred_fallthru
          _
      $region36: #{tpu_custom_call.1} parent=5 // pred_fallthru
        _
      %p324 = scmp.le.s32.totalorder 1, %s20
      %p325 = scmp.lt.s32.totalorder %s20, 3
      %p326 = pnand %p324, %p325
      %p327 = pneg %p326
      // Predicated region
      $region45: #{tpu_custom_call.1} parent=5 // pred_check
        _
      $region46: #{tpu_custom_call.1} parent=5 // pred_check_branch
        %329 = sbr.rel (%p326) target = $region48
      $region47: #{tpu_custom_call.1} parent=5 // pred_region
        %s330 = ssub.s32 %s20, 1
        %s331 = sand.u32 %s47, 1
        %s332 = scalar_lea.sflag [#allocation5], %s331
        %s333 = sand.u32 %s47, 1
        %s334 = smul.addr %s333, 64
        %s335 = scalar_lea.vmem [#allocation4], %s334
        // Predicated region
        $region49: #{tpu_custom_call.1} parent=47 // pred_check
          %p336 = pneg %p60
        $region50: #{tpu_custom_call.1} parent=47 // pred_check_branch
          %338 = sbr.rel (%p336) target = $region52
        $region51: #{tpu_custom_call.1} parent=47 // pred_region
          %339 = dma.done %s332, 1024
        $region52: #{tpu_custom_call.1} parent=47 // pred_fallthru
          _
        %s340 = sand.u32 %s25, 1
        %s341 = scalar_lea.sflag [#allocation7], %s340
        %s342 = sand.u32 %s75, 1
        %s343 = smul.addr %s342, 8
        %s344 = scalar_lea.vmem [#allocation6], %s343
        // Predicated region
        $region53: #{tpu_custom_call.1} parent=47 // pred_check
          %p345 = pneg %p88
        $region54: #{tpu_custom_call.1} parent=47 // pred_check_branch
          %347 = sbr.rel (%p345) target = $region56
        $region55: #{tpu_custom_call.1} parent=47 // pred_region
          %348 = dma.done %s341, 128
        $region56: #{tpu_custom_call.1} parent=47 // pred_fallthru
          _
        // Predicated region
        $region57: #{tpu_custom_call.1} parent=47 // pred_check
          %p349 = pneg %p135
        $region58: #{tpu_custom_call.1} parent=47 // pred_check_branch
          %351 = sbr.rel (%p349) target = $region60
        $region59: #{tpu_custom_call.1} parent=47 // pred_region
          %352 = dma.done [#allocation7], 1024
        $region60: #{tpu_custom_call.1} parent=47 // pred_fallthru
          _
        // Predicated region
        $region61: #{tpu_custom_call.1} parent=47 // pred_check
          %p353 = pneg %p156
        $region62: #{tpu_custom_call.1} parent=47 // pred_check_branch
          %355 = sbr.rel (%p353) target = $region64
        $region63: #{tpu_custom_call.1} parent=47 // pred_region
          %356 = dma.done [#allocation10], 1024
        $region64: #{tpu_custom_call.1} parent=47 // pred_fallthru
          _
        %s357 = sand.u32 %s47, 1
        %s358 = scalar_lea.sflag [#allocation5], %s357
        %s359 = sand.u32 %s47, 1
        %s360 = smul.addr %s359, 64
        %s361 = scalar_lea.vmem [#allocation4], %s360
        %p362 = pneg %p60
        %p363 = pneg %p57
        %s364 = sand.u32 %s25, 1
        %s365 = scalar_lea.sflag [#allocation7], %s364
        %s366 = sand.u32 %s75, 1
        %s367 = smul.addr %s366, 8
        %s368 = scalar_lea.vmem [#allocation6], %s367
        %p369 = pneg %p88
        %p370 = pneg %p85
        %p371 = scmp.lt.s32.totalorder %s29, 0
        %s372 = scalar_select %p371, %s29, 0
        %s373 = smul.addr %s372, 8
        %s374 = scalar_lea.vmem %s2, %s373
        %p375 = pneg %p114
        %p376 = pneg %p111
        %p377 = pneg %p135
        %p378 = pneg %p132
        %p379 = pneg %p156
        %p380 = pneg %p153
        %p381 = pneg %p177
        %p382 = pneg %p174
        %p383 = pneg %p198
        %p384 = pneg %p195
        %p385 = pneg %p224
        %p386 = pneg %p221
        %p387 = scmp.lt.s32.totalorder %s29, 0
        %s388 = scalar_select %p387, %s29, 0
        %s389 = smul.addr %s388, 8
        %s390 = scalar_lea.vmem %s7, %s389
        %s391 = smul.u32 8, %s29
        %p392 = scmp.lt.s32.totalorder %s29, 0
        %s393 = scalar_select %p392, %s29, 0
        %s394 = smul.addr %s393, 8
        %s395 = scalar_lea.vmem %s2, %s394
        %p396 = scmp.lt.s32.totalorder %s29, 0
        %s397 = scalar_select %p396, %s29, 0
        %s398 = smul.addr %s397, 8
        %s399 = scalar_lea.vmem %s7, %s398
        %p400 = scmp.eq.s32.totalorder %s30, 0
        // Predicated region
        $region65: #{tpu_custom_call.1} parent=47 // pred_check
          %p401 = pneg %p400
        $region66: #{tpu_custom_call.1} parent=47 // pred_check_branch
          %403 = sbr.rel (%p401) target = $region68
        $region67: #{tpu_custom_call.1} parent=47 // pred_region
          %vm404 = vcmask 261120
          %405 = vst.msk [vmem:[#allocation2] sm:$0xff] %vm404, 0.0
        $region68: #{tpu_custom_call.1} parent=47 // pred_fallthru
          _
        %v406 = vld [vmem:[%s335] sm:$0xff]
        %v407 = vld [vmem:[%s335 + $0x8] sm:$0xff]
        %v408 = vld [vmem:[%s335 + $0x10] sm:$0xff]
        %v409 = vld [vmem:[%s335 + $0x18] sm:$0xff]
        %v410 = vld [vmem:[%s335 + $0x20] sm:$0xff]
        %v411 = vld [vmem:[%s335 + $0x28] sm:$0xff]
        %v412 = vld [vmem:[%s335 + $0x30] sm:$0xff]
        %v413 = vld [vmem:[%s335 + $0x38] sm:$0xff]
        %v414 = vmul.f32 %v406, %v406
        %v415 = vmul.f32 %v407, %v407
        %v416 = vmul.f32 %v408, %v408
        %v417 = vmul.f32 %v409, %v409
        %v418 = vmul.f32 %v410, %v410
        %v419 = vmul.f32 %v411, %v411
        %v420 = vmul.f32 %v412, %v412
        %v421 = vmul.f32 %v413, %v413
        %vm422 = vcmask 261120
        %v423 = vsel %vm422, %v414, 0.0
        %424 = vadd.xlane.f32.xlu0 %v423
        %v425 = vpop.xlane.xlu0 %424
        %v426 = vsel %vm422, %v415, 0.0
        %427 = vadd.xlane.f32.xlu0 %v426
        %v428 = vpop.xlane.xlu0 %427
        %v429 = vsel %vm422, %v416, 0.0
        %430 = vadd.xlane.f32.xlu0 %v429
        %v431 = vpop.xlane.xlu0 %430
        %v432 = vsel %vm422, %v417, 0.0
        %433 = vadd.xlane.f32.xlu0 %v432
        %v434 = vpop.xlane.xlu0 %433
        %v435 = vsel %vm422, %v418, 0.0
        %436 = vadd.xlane.f32.xlu0 %v435
        %v437 = vpop.xlane.xlu0 %436
        %v438 = vsel %vm422, %v419, 0.0
        %439 = vadd.xlane.f32.xlu0 %v438
        %v440 = vpop.xlane.xlu0 %439
        %v441 = vsel %vm422, %v420, 0.0
        %442 = vadd.xlane.f32.xlu0 %v441
        %v443 = vpop.xlane.xlu0 %442
        %v444 = vsel %vm422, %v421, 0.0
        %445 = vadd.xlane.f32.xlu0 %v444
        %v446 = vpop.xlane.xlu0 %445
        %v447 = vmax.f32 %v425, 1e-24
        %v448 = vmax.f32 %v428, 1e-24
        %v449 = vmax.f32 %v431, 1e-24
        %v450 = vmax.f32 %v434, 1e-24
        %v451 = vmax.f32 %v437, 1e-24
        %v452 = vmax.f32 %v440, 1e-24
        %v453 = vmax.f32 %v443, 1e-24
        %v454 = vmax.f32 %v446, 1e-24
        %v455 = vrsqrt.pop %v447
        %v456 = vrsqrt.pop %v448
        %v457 = vrsqrt.pop %v449
        %v458 = vrsqrt.pop %v450
        %v459 = vrsqrt.pop %v451
        %v460 = vrsqrt.pop %v452
        %v461 = vrsqrt.pop %v453
        %v462 = vrsqrt.pop %v454
        %v463 = vmul.f32 %v406, %v455
        %v464 = vmul.f32 %v407, %v456
        %v465 = vmul.f32 %v408, %v457
        %v466 = vmul.f32 %v409, %v458
        %v467 = vmul.f32 %v410, %v459
        %v468 = vmul.f32 %v411, %v460
        %v469 = vmul.f32 %v412, %v461
        %v470 = vmul.f32 %v413, %v462
        %v471 = vld [vmem:[%s344] sm:$0xff]
        %v472 = vmul.f32 %v471, %v471
        %v473 = vsel %vm422, %v472, 0.0
        %474 = vadd.xlane.f32.xlu0 %v473
        %v475 = vpop.xlane.xlu0 %474
        %v476 = vmax.f32 %v475, 1e-24
        %v477 = vrsqrt.pop %v476
        %v478 = vmul.f32 %v471, %v477
        // Predicated region
        $region69: #{tpu_custom_call.1} parent=47 // pred_check
          %p479 = pneg %p400
        $region70: #{tpu_custom_call.1} parent=47 // pred_check_branch
          %481 = sbr.rel (%p479) target = $region72
        $region71: #{tpu_custom_call.1} parent=47 // pred_region
          %482 = vst.msk [vmem:[#allocation3] sm:$0xff] %vm422, %v478
        $region72: #{tpu_custom_call.1} parent=47 // pred_fallthru
          _
        %s483 = scalar_select %p400, 1.0, 0.5
        %v484 = vstv %s483
        %v485 = vmul.f32 %v478, %v484
        %v487 = vcombine.high %v485, %v485
        %v489 = vunpack.c.l.s4 1966171168
        %v490 = vunpack.c.0.s8 %v489
        %v491 = vlaneseq
        %v492 = vshrl.u32 %v491, 7
        %v493 = vsub.s32 %v490, %v492
        %v494 = vrot.slane %v485, %v493
        %v496 = vunpack.c.l.s4 1966171168
        %v497 = vunpack.c.0.s8 %v496
        %v498 = vlaneseq
        %v499 = vshrl.u32 %v498, 7
        %v500 = vsub.s32 %v497, %v499
        %v501 = vrot.slane %v487, %v500
        %v502 = vcombine.high %v494, %v494
        %v503 = vcombine.high %v501, %v501
        %v505 = vunpack.c.l.s4 1966171168
        %v506 = vunpack.c.0.s8 %v505
        %v507 = vlaneseq
        %v508 = vshrl.u32 %v507, 7
        %v509 = vsub.s32 %v506, %v508
        %v510 = vrot.slane %v494, %v509
        %v512 = vunpack.c.l.s4 1966171168
        %v513 = vunpack.c.0.s8 %v512
        %v514 = vlaneseq
        %v515 = vshrl.u32 %v514, 7
        %v516 = vsub.s32 %v513, %v515
        %v517 = vrot.slane %v501, %v516
        %v519 = vunpack.c.l.s4 1966171168
        %v520 = vunpack.c.0.s8 %v519
        %v521 = vlaneseq
        %v522 = vshrl.u32 %v521, 7
        %v523 = vsub.s32 %v520, %v522
        %v524 = vrot.slane %v502, %v523
        %v526 = vunpack.c.l.s4 1966171168
        %v527 = vunpack.c.0.s8 %v526
        %v528 = vlaneseq
        %v529 = vshrl.u32 %v528, 7
        %v530 = vsub.s32 %v527, %v529
        %v531 = vrot.slane %v503, %v530
        %v532 = vcombine.high %v510, %v510
        %v533 = vcombine.high %v517, %v517
        %v534 = vcombine.high %v524, %v524
        %v535 = vcombine.high %v531, %v531
        %v536 = vlaneseq
        %v537 = vshrl.u32 %v536, 7
        %v538 = vsub.s32 0, %v537
        %v539 = vrot.slane %v510, %v538
        %v540 = vlaneseq
        %v541 = vshrl.u32 %v540, 7
        %v542 = vsub.s32 0, %v541
        %v543 = vrot.slane %v524, %v542
        %v544 = vlaneseq
        %v545 = vshrl.u32 %v544, 7
        %v546 = vsub.s32 0, %v545
        %v547 = vrot.slane %v532, %v546
        %v548 = vlaneseq
        %v549 = vshrl.u32 %v548, 7
        %v550 = vsub.s32 0, %v549
        %v551 = vrot.slane %v534, %v550
        %v552 = vlaneseq
        %v553 = vshrl.u32 %v552, 7
        %v554 = vsub.s32 0, %v553
        %v555 = vrot.slane %v517, %v554
        %v556 = vlaneseq
        %v557 = vshrl.u32 %v556, 7
        %v558 = vsub.s32 0, %v557
        %v559 = vrot.slane %v531, %v558
        %v560 = vlaneseq
        %v561 = vshrl.u32 %v560, 7
        %v562 = vsub.s32 0, %v561
        %v563 = vrot.slane %v533, %v562
        %v564 = vlaneseq
        %v565 = vshrl.u32 %v564, 7
        %v566 = vsub.s32 0, %v565
        %v567 = vrot.slane %v535, %v566
        %v576 = vmul.f32 %v463, %v539
        %v577 = vmul.f32 %v464, %v543
        %v578 = vmul.f32 %v465, %v547
        %v579 = vmul.f32 %v466, %v551
        %v580 = vmul.f32 %v467, %v555
        %v581 = vmul.f32 %v468, %v559
        %v582 = vmul.f32 %v469, %v563
        %v583 = vmul.f32 %v470, %v567
        %s584 = smul.u32 %s30, 32
        %s585 = scalar_lea.vmem [#allocation8], %s584
        %v586 = vld [vmem:[%s585] sm:$0xff]
        %v587 = vld [vmem:[%s585 + $0x8] sm:$0xff]
        %v588 = vld [vmem:[%s585 + $0x10] sm:$0xff]
        %v589 = vld [vmem:[%s585 + $0x18] sm:$0xff]
        %s590 = scalar_lea.vmem [#allocation9], %s584
        %v591 = vld [vmem:[%s590] sm:$0xff]
        %v592 = vld [vmem:[%s590 + $0x8] sm:$0xff]
        %v593 = vld [vmem:[%s590 + $0x10] sm:$0xff]
        %v594 = vld [vmem:[%s590 + $0x18] sm:$0xff]
        %v596 = vsel %vm422, %v576, 0
        %v599 = vsel %vm422, %v577, 0
        %v602 = vsel %vm422, %v578, 0
        %v605 = vsel %vm422, %v579, 0
        %v608 = vsel %vm422, %v580, 0
        %v611 = vsel %vm422, %v581, 0
        %v614 = vsel %vm422, %v582, 0
        %v617 = vsel %vm422, %v583, 0
        %619 = vmatprep.subr.mxu0 0.0
        %620 = vmatpush1.msra.mxu0 %v591
        %621 = vmatprep.subr.mxu0 0.0
        %622 = vmatpush1.msra.mxu0 %v592
        %623 = vmatprep.subr.mxu0 0.0
        %624 = vmatpush1.msra.mxu0 %v593
        %625 = vmatprep.subr.mxu0 0.0
        %626 = vmatpush1.msra.mxu0 %v594
        %627 = vmatprep.subr.mxu0 0.0
        %628 = vmatpush1.msra.mxu0 0.0
        %629 = vmatprep.subr.mxu0 0.0
        %630 = vmatpush1.msra.mxu0 0.0
        %631 = vmatprep.subr.mxu0 0.0
        %632 = vmatpush1.msra.mxu0 0.0
        %633 = vmatprep.subr.mxu0 0.0
        %634 = vmatpush1.msra.mxu0 0.0
        %635 = vmatprep.subr.mxu0 0.0
        %636 = vmatpush1.msra.mxu0 0.0
        %637 = vmatprep.subr.mxu0 0.0
        %638 = vmatpush1.msra.mxu0 0.0
        %639 = vmatprep.subr.mxu0 0.0
        %640 = vmatpush1.msra.mxu0 0.0
        %641 = vmatprep.subr.mxu0 0.0
        %642 = vmatpush1.msra.mxu0 0.0
        %643 = vmatprep.subr.mxu0 0.0
        %644 = vmatpush1.msra.mxu0 0.0
        %645 = vmatprep.subr.mxu0 0.0
        %646 = vmatpush1.msra.mxu0 0.0
        %647 = vmatprep.subr.mxu0 0.0
        %648 = vmatpush1.msra.mxu0 0.0
        %649 = vmatprep.subr.mxu0 0.0
        %650 = vmatpush1.msra.mxu0 0.0
        %651 = vmatprep.subr.mxu0 0.0
        %652 = vmatpush1.msra.mxu0 0.0
        %653 = vmatprep.subr.mxu0 0.0
        %654 = vmatpush1.msra.mxu0 0.0
        %655 = vmatprep.subr.mxu0 0.0
        %656 = vmatpush1.msra.mxu0 0.0
        %657 = vmatprep.subr.mxu0 0.0
        %658 = vmatpush1.msra.mxu0 0.0
        %659 = vmatprep.subr.mxu0 0.0
        %660 = vmatpush1.msra.mxu0 0.0
        %661 = vmatprep.subr.mxu0 0.0
        %662 = vmatpush1.msra.mxu0 0.0
        %663 = vmatprep.subr.mxu0 0.0
        %664 = vmatpush1.msra.mxu0 0.0
        %665 = vmatprep.subr.mxu0 0.0
        %666 = vmatpush1.msra.mxu0 0.0
        %667 = vmatprep.subr.mxu0 0.0
        %668 = vmatpush1.msra.mxu0 0.0
        %669 = vmatprep.subr.mxu0 0.0
        %670 = vmatpush1.msra.mxu0 0.0
        %671 = vmatprep.subr.mxu0 0.0
        %672 = vmatpush1.msra.mxu0 0.0
        %673 = vmatprep.subr.mxu0 0.0
        %674 = vmatpush1.msra.mxu0 0.0
        %675 = vmatprep.subr.mxu0 0.0
        %676 = vmatpush1.msra.mxu0 0.0
        %677 = vmatprep.subr.mxu0 0.0
        %678 = vmatpush1.msra.mxu0 0.0
        %679 = vmatprep.subr.mxu0 0.0
        %680 = vmatpush1.msra.mxu0 0.0
        %681 = vmatprep.subr.mxu0 0.0
        %682 = vmatpush1.msra.mxu0 0.0
        %683 = vmatprep.mubr.f32.mxu0 0.0
        %684 = vmatmul.mubr.f32.gmra.mrb[0].mxu0 %v596
        %v685 = vpop.f32.mrb[0].mxu0
        %v686 = vadd.f32 0.0, %v685
        %v687 = vpop.f32.mrb[0].mxu0
        %688 = vmatprep.mubr.f32.mxu0 0.0
        %689 = vmatmul.mubr.f32.gmra.mrb[0].mxu0 %v599
        %v690 = vpop.f32.mrb[0].mxu0
        %v691 = vadd.f32 0.0, %v690
        %v692 = vpop.f32.mrb[0].mxu0
        %693 = vmatprep.mubr.f32.mxu0 0.0
        %694 = vmatmul.mubr.f32.gmra.mrb[0].mxu0 %v602
        %v695 = vpop.f32.mrb[0].mxu0
        %v696 = vadd.f32 0.0, %v695
        %v697 = vpop.f32.mrb[0].mxu0
        %698 = vmatprep.mubr.f32.mxu0 0.0
        %699 = vmatmul.mubr.f32.gmra.mrb[0].mxu0 %v605
        %v700 = vpop.f32.mrb[0].mxu0
        %v701 = vadd.f32 0.0, %v700
        %v702 = vpop.f32.mrb[0].mxu0
        %703 = vmatprep.mubr.f32.mxu0 0.0
        %704 = vmatmul.mubr.f32.gmra.mrb[0].mxu0 %v608
        %v705 = vpop.f32.mrb[0].mxu0
        %v706 = vadd.f32 0.0, %v705
        %v707 = vpop.f32.mrb[0].mxu0
        %708 = vmatprep.mubr.f32.mxu0 0.0
        %709 = vmatmul.mubr.f32.gmra.mrb[0].mxu0 %v611
        %v710 = vpop.f32.mrb[0].mxu0
        %v711 = vadd.f32 0.0, %v710
        %v712 = vpop.f32.mrb[0].mxu0
        %713 = vmatprep.mubr.f32.mxu0 0.0
        %714 = vmatmul.mubr.f32.gmra.mrb[0].mxu0 %v614
        %v715 = vpop.f32.mrb[0].mxu0
        %v716 = vadd.f32 0.0, %v715
        %v717 = vpop.f32.mrb[0].mxu0
        %718 = vmatprep.mubr.f32.mxu0 0.0
        %719 = vmatmul.mubr.f32.gmra.mrb[0].mxu0 %v617
        %v720 = vpop.f32.mrb[0].mxu0
        %v721 = vadd.f32 0.0, %v720
        %v722 = vpop.f32.mrb[0].mxu0
        %723 = vdwg.mxu0
        %v725 = vsel %vm422, %v463, 0
        %v728 = vsel %vm422, %v464, 0
        %v731 = vsel %vm422, %v465, 0
        %v734 = vsel %vm422, %v466, 0
        %v737 = vsel %vm422, %v467, 0
        %v740 = vsel %vm422, %v468, 0
        %v743 = vsel %vm422, %v469, 0
        %v746 = vsel %vm422, %v470, 0
        %748 = vmatprep.subr.mxu0 0.0
        %749 = vmatpush1.msra.mxu0 %v586
        %750 = vmatprep.subr.mxu0 0.0
        %751 = vmatpush1.msra.mxu0 %v587
        %752 = vmatprep.subr.mxu0 0.0
        %753 = vmatpush1.msra.mxu0 %v588
        %754 = vmatprep.subr.mxu0 0.0
        %755 = vmatpush1.msra.mxu0 %v589
        %756 = vmatprep.subr.mxu0 0.0
        %757 = vmatpush1.msra.mxu0 0.0
        %758 = vmatprep.subr.mxu0 0.0
        %759 = vmatpush1.msra.mxu0 0.0
        %760 = vmatprep.subr.mxu0 0.0
        %761 = vmatpush1.msra.mxu0 0.0
        %762 = vmatprep.subr.mxu0 0.0
        %763 = vmatpush1.msra.mxu0 0.0
        %764 = vmatprep.subr.mxu0 0.0
        %765 = vmatpush1.msra.mxu0 0.0
        %766 = vmatprep.subr.mxu0 0.0
        %767 = vmatpush1.msra.mxu0 0.0
        %768 = vmatprep.subr.mxu0 0.0
        %769 = vmatpush1.msra.mxu0 0.0
        %770 = vmatprep.subr.mxu0 0.0
        %771 = vmatpush1.msra.mxu0 0.0
        %772 = vmatprep.subr.mxu0 0.0
        %773 = vmatpush1.msra.mxu0 0.0
        %774 = vmatprep.subr.mxu0 0.0
        %775 = vmatpush1.msra.mxu0 0.0
        %776 = vmatprep.subr.mxu0 0.0
        %777 = vmatpush1.msra.mxu0 0.0
        %778 = vmatprep.subr.mxu0 0.0
        %779 = vmatpush1.msra.mxu0 0.0
        %780 = vmatprep.subr.mxu0 0.0
        %781 = vmatpush1.msra.mxu0 0.0
        %782 = vmatprep.subr.mxu0 0.0
        %783 = vmatpush1.msra.mxu0 0.0
        %784 = vmatprep.subr.mxu0 0.0
        %785 = vmatpush1.msra.mxu0 0.0
        %786 = vmatprep.subr.mxu0 0.0
        %787 = vmatpush1.msra.mxu0 0.0
        %788 = vmatprep.subr.mxu0 0.0
        %789 = vmatpush1.msra.mxu0 0.0
        %790 = vmatprep.subr.mxu0 0.0
        %791 = vmatpush1.msra.mxu0 0.0
        %792 = vmatprep.subr.mxu0 0.0
        %793 = vmatpush1.msra.mxu0 0.0
        %794 = vmatprep.subr.mxu0 0.0
        %795 = vmatpush1.msra.mxu0 0.0
        %796 = vmatprep.subr.mxu0 0.0
        %797 = vmatpush1.msra.mxu0 0.0
        %798 = vmatprep.subr.mxu0 0.0
        %799 = vmatpush1.msra.mxu0 0.0
        %800 = vmatprep.subr.mxu0 0.0
        %801 = vmatpush1.msra.mxu0 0.0
        %802 = vmatprep.subr.mxu0 0.0
        %803 = vmatpush1.msra.mxu0 0.0
        %804 = vmatprep.subr.mxu0 0.0
        %805 = vmatpush1.msra.mxu0 0.0
        %806 = vmatprep.subr.mxu0 0.0
        %807 = vmatpush1.msra.mxu0 0.0
        %808 = vmatprep.subr.mxu0 0.0
        %809 = vmatpush1.msra.mxu0 0.0
        %810 = vmatprep.subr.mxu0 0.0
        %811 = vmatpush1.msra.mxu0 0.0
        %812 = vmatprep.mubr.f32.mxu0 0.0
        %813 = vmatmul.mubr.f32.gmra.mrb[0].mxu0 %v725
        %v814 = vpop.f32.mrb[0].mxu0
        %v815 = vadd.f32 %v686, %v814
        %v816 = vpop.f32.mrb[0].mxu0
        %817 = vmatprep.mubr.f32.mxu0 0.0
        %818 = vmatmul.mubr.f32.gmra.mrb[0].mxu0 %v728
        %v819 = vpop.f32.mrb[0].mxu0
        %v820 = vadd.f32 %v691, %v819
        %v821 = vpop.f32.mrb[0].mxu0
        %822 = vmatprep.mubr.f32.mxu0 0.0
        %823 = vmatmul.mubr.f32.gmra.mrb[0].mxu0 %v731
        %v824 = vpop.f32.mrb[0].mxu0
        %v825 = vadd.f32 %v696, %v824
        %v826 = vpop.f32.mrb[0].mxu0
        %827 = vmatprep.mubr.f32.mxu0 0.0
        %828 = vmatmul.mubr.f32.gmra.mrb[0].mxu0 %v734
        %v829 = vpop.f32.mrb[0].mxu0
        %v830 = vadd.f32 %v701, %v829
        %v831 = vpop.f32.mrb[0].mxu0
        %832 = vmatprep.mubr.f32.mxu0 0.0
        %833 = vmatmul.mubr.f32.gmra.mrb[0].mxu0 %v737
        %v834 = vpop.f32.mrb[0].mxu0
        %v835 = vadd.f32 %v706, %v834
        %v836 = vpop.f32.mrb[0].mxu0
        %837 = vmatprep.mubr.f32.mxu0 0.0
        %838 = vmatmul.mubr.f32.gmra.mrb[0].mxu0 %v740
        %v839 = vpop.f32.mrb[0].mxu0
        %v840 = vadd.f32 %v711, %v839
        %v841 = vpop.f32.mrb[0].mxu0
        %842 = vmatprep.mubr.f32.mxu0 0.0
        %843 = vmatmul.mubr.f32.gmra.mrb[0].mxu0 %v743
        %v844 = vpop.f32.mrb[0].mxu0
        %v845 = vadd.f32 %v716, %v844
        %v846 = vpop.f32.mrb[0].mxu0
        %847 = vmatprep.mubr.f32.mxu0 0.0
        %848 = vmatmul.mubr.f32.gmra.mrb[0].mxu0 %v746
        %v849 = vpop.f32.mrb[0].mxu0
        %v850 = vadd.f32 %v721, %v849
        %v851 = vpop.f32.mrb[0].mxu0
        %852 = vdwg.mxu0
        %s853 = smul.u32 %s30, 8
        %s854 = scalar_lea.vmem %s5, %s853
        %v855 = vld [vmem:[%s854] sm:$0xff]
        %v856 = vadd.f32 %v815, %v855
        %v857 = vadd.f32 %v820, %v855
        %v858 = vadd.f32 %v825, %v855
        %v859 = vadd.f32 %v830, %v855
        %v860 = vadd.f32 %v835, %v855
        %v861 = vadd.f32 %v840, %v855
        %v862 = vadd.f32 %v845, %v855
        %v863 = vadd.f32 %v850, %v855
        %v864 = vxor.u32 %v856, 2147483648
        %v865 = vxor.u32 %v857, 2147483648
        %v866 = vxor.u32 %v858, 2147483648
        %v867 = vxor.u32 %v859, 2147483648
        %v868 = vxor.u32 %v860, 2147483648
        %v869 = vxor.u32 %v861, 2147483648
        %v870 = vxor.u32 %v862, 2147483648
        %v871 = vxor.u32 %v863, 2147483648
        %v872 = vmul.f32 %v864, 1.442695
        %v873 = vpow.pop %v872
        %v874 = vmul.f32 %v865, 1.442695
        %v875 = vpow.pop %v874
        %v876 = vmul.f32 %v866, 1.442695
        %v877 = vpow.pop %v876
        %v878 = vmul.f32 %v867, 1.442695
        %v879 = vpow.pop %v878
        %v880 = vmul.f32 %v868, 1.442695
        %v881 = vpow.pop %v880
        %v882 = vmul.f32 %v869, 1.442695
        %v883 = vpow.pop %v882
        %v884 = vmul.f32 %v870, 1.442695
        %v885 = vpow.pop %v884
        %v886 = vmul.f32 %v871, 1.442695
        %v887 = vpow.pop %v886
        %v888 = vadd.f32 %v873, 1.0
        %v889 = vadd.f32 %v875, 1.0
        %v890 = vadd.f32 %v877, 1.0
        %v891 = vadd.f32 %v879, 1.0
        %v892 = vadd.f32 %v881, 1.0
        %v893 = vadd.f32 %v883, 1.0
        %v894 = vadd.f32 %v885, 1.0
        %v895 = vadd.f32 %v887, 1.0
        %v896 = vrcp.pop %v888
        %v897 = vmul.f32 1.0, %v896
        %v898 = vrcp.pop %v889
        %v899 = vmul.f32 1.0, %v898
        %v900 = vrcp.pop %v890
        %v901 = vmul.f32 1.0, %v900
        %v902 = vrcp.pop %v891
        %v903 = vmul.f32 1.0, %v902
        %v904 = vrcp.pop %v892
        %v905 = vmul.f32 1.0, %v904
        %v906 = vrcp.pop %v893
        %v907 = vmul.f32 1.0, %v906
        %v908 = vrcp.pop %v894
        %v909 = vmul.f32 1.0, %v908
        %v910 = vrcp.pop %v895
        %v911 = vmul.f32 1.0, %v910
        %s912 = scalar_lea.vmem %s6, %s30
        %v913 = vld [vmem:[%s912] sm:$0x1]
        %v915 = vlaneseq
        %v916 = vshrl.u32 %v915, 7
        %v917 = vsub.s32 0, %v916
        %v918 = vrot.slane %v913, %v917
        %v920 = vmul.f32 %v897, %v918
        %v921 = vmul.f32 %v899, %v918
        %v922 = vmul.f32 %v901, %v918
        %v923 = vmul.f32 %v903, %v918
        %v924 = vmul.f32 %v905, %v918
        %v925 = vmul.f32 %v907, %v918
        %v926 = vmul.f32 %v909, %v918
        %v927 = vmul.f32 %v911, %v918
        %v928 = vsel %vm422, %v920, 0.0
        %929 = vadd.xlane.f32.xlu0 %v928
        %v930 = vpop.xlane.xlu0 %929
        %v931 = vsel %vm422, %v921, 0.0
        %932 = vadd.xlane.f32.xlu0 %v931
        %v933 = vpop.xlane.xlu0 %932
        %v934 = vsel %vm422, %v922, 0.0
        %935 = vadd.xlane.f32.xlu0 %v934
        %v936 = vpop.xlane.xlu0 %935
        %v937 = vsel %vm422, %v923, 0.0
        %938 = vadd.xlane.f32.xlu0 %v937
        %v939 = vpop.xlane.xlu0 %938
        %v940 = vsel %vm422, %v924, 0.0
        %941 = vadd.xlane.f32.xlu0 %v940
        %v942 = vpop.xlane.xlu0 %941
        %v943 = vsel %vm422, %v925, 0.0
        %944 = vadd.xlane.f32.xlu0 %v943
        %v945 = vpop.xlane.xlu0 %944
        %v946 = vsel %vm422, %v926, 0.0
        %947 = vadd.xlane.f32.xlu0 %v946
        %v948 = vpop.xlane.xlu0 %947
        %v949 = vsel %vm422, %v927, 0.0
        %950 = vadd.xlane.f32.xlu0 %v949
        %v951 = vpop.xlane.xlu0 %950
        %v952 = vlaneseq
        %v953 = vshrl.u32 %v952, 7
        %v954 = vld [vmem:[%s395] sm:$0xff]
        %v955 = vcombine.high %v954, %v954
        %v957 = vunpack.c.l.s4 1966171168
        %v958 = vunpack.c.0.s8 %v957
        %v959 = vlaneseq
        %v960 = vshrl.u32 %v959, 7
        %v961 = vsub.s32 %v958, %v960
        %v962 = vrot.slane %v954, %v961
        %v964 = vunpack.c.l.s4 1966171168
        %v965 = vunpack.c.0.s8 %v964
        %v966 = vlaneseq
        %v967 = vshrl.u32 %v966, 7
        %v968 = vsub.s32 %v965, %v967
        %v969 = vrot.slane %v955, %v968
        %v970 = vcombine.high %v962, %v962
        %v971 = vcombine.high %v969, %v969
        %v973 = vunpack.c.l.s4 1966171168
        %v974 = vunpack.c.0.s8 %v973
        %v975 = vlaneseq
        %v976 = vshrl.u32 %v975, 7
        %v977 = vsub.s32 %v974, %v976
        %v978 = vrot.slane %v962, %v977
        %v980 = vunpack.c.l.s4 1966171168
        %v981 = vunpack.c.0.s8 %v980
        %v982 = vlaneseq
        %v983 = vshrl.u32 %v982, 7
        %v984 = vsub.s32 %v981, %v983
        %v985 = vrot.slane %v969, %v984
        %v987 = vunpack.c.l.s4 1966171168
        %v988 = vunpack.c.0.s8 %v987
        %v989 = vlaneseq
        %v990 = vshrl.u32 %v989, 7
        %v991 = vsub.s32 %v988, %v990
        %v992 = vrot.slane %v970, %v991
        %v994 = vunpack.c.l.s4 1966171168
        %v995 = vunpack.c.0.s8 %v994
        %v996 = vlaneseq
        %v997 = vshrl.u32 %v996, 7
        %v998 = vsub.s32 %v995, %v997
        %v999 = vrot.slane %v971, %v998
        %v1000 = vcombine.high %v978, %v978
        %v1001 = vcombine.high %v985, %v985
        %v1002 = vcombine.high %v992, %v992
        %v1003 = vcombine.high %v999, %v999
        %v1004 = vlaneseq
        %v1005 = vshrl.u32 %v1004, 7
        %v1006 = vsub.s32 0, %v1005
        %v1007 = vrot.slane %v978, %v1006
        %v1008 = vlaneseq
        %v1009 = vshrl.u32 %v1008, 7
        %v1010 = vsub.s32 0, %v1009
        %v1011 = vrot.slane %v992, %v1010
        %v1012 = vlaneseq
        %v1013 = vshrl.u32 %v1012, 7
        %v1014 = vsub.s32 0, %v1013
        %v1015 = vrot.slane %v1000, %v1014
        %v1016 = vlaneseq
        %v1017 = vshrl.u32 %v1016, 7
        %v1018 = vsub.s32 0, %v1017
        %v1019 = vrot.slane %v1002, %v1018
        %v1020 = vlaneseq
        %v1021 = vshrl.u32 %v1020, 7
        %v1022 = vsub.s32 0, %v1021
        %v1023 = vrot.slane %v985, %v1022
        %v1024 = vlaneseq
        %v1025 = vshrl.u32 %v1024, 7
        %v1026 = vsub.s32 0, %v1025
        %v1027 = vrot.slane %v999, %v1026
        %v1028 = vlaneseq
        %v1029 = vshrl.u32 %v1028, 7
        %v1030 = vsub.s32 0, %v1029
        %v1031 = vrot.slane %v1001, %v1030
        %v1032 = vlaneseq
        %v1033 = vshrl.u32 %v1032, 7
        %v1034 = vsub.s32 0, %v1033
        %v1035 = vrot.slane %v1003, %v1034
        %vm1036 = vcmp.lt.s32.totalorder %v953, %v1007
        %vm1037 = vcmp.lt.s32.totalorder %v953, %v1011
        %vm1038 = vcmp.lt.s32.totalorder %v953, %v1015
        %vm1039 = vcmp.lt.s32.totalorder %v953, %v1019
        %vm1040 = vcmp.lt.s32.totalorder %v953, %v1023
        %vm1041 = vcmp.lt.s32.totalorder %v953, %v1027
        %vm1042 = vcmp.lt.s32.totalorder %v953, %v1031
        %vm1043 = vcmp.lt.s32.totalorder %v953, %v1035
        %v1044 = vsel %vm1036, 1, 0
        %v1045 = vsel %vm1037, 1, 0
        %v1046 = vsel %vm1038, 1, 0
        %v1047 = vsel %vm1039, 1, 0
        %v1048 = vsel %vm1040, 1, 0
        %v1049 = vsel %vm1041, 1, 0
        %v1050 = vsel %vm1042, 1, 0
        %v1051 = vsel %vm1043, 1, 0
        %v1052 = vcvt.s32.f32 %v1044
        %v1053 = vcvt.s32.f32 %v1045
        %v1054 = vcvt.s32.f32 %v1046
        %v1055 = vcvt.s32.f32 %v1047
        %v1056 = vcvt.s32.f32 %v1048
        %v1057 = vcvt.s32.f32 %v1049
        %v1058 = vcvt.s32.f32 %v1050
        %v1059 = vcvt.s32.f32 %v1051
        %v1060 = vmul.f32 %v930, %v1052
        %v1061 = vmul.f32 %v933, %v1053
        %v1062 = vmul.f32 %v936, %v1054
        %v1063 = vmul.f32 %v939, %v1055
        %v1064 = vmul.f32 %v942, %v1056
        %v1065 = vmul.f32 %v945, %v1057
        %v1066 = vmul.f32 %v948, %v1058
        %v1067 = vmul.f32 %v951, %v1059
        %vm1068 = vcmask 7168
        %v1069 = vsel %vm1068, %v1060, -inf
        %v1070 = vrot.slane %v1069, 4
        %v1071 = vmax.f32 %v1069, %v1070
        %v1072 = vrot.slane %v1071, 2
        %v1073 = vmax.f32 %v1071, %v1072
        %v1074 = vrot.slane %v1073, 1
        %v1075 = vmax.f32 %v1073, %v1074
        %v1076 = vsel %vm1068, %v1061, -inf
        %v1077 = vrot.slane %v1076, 4
        %v1078 = vmax.f32 %v1076, %v1077
        %v1079 = vrot.slane %v1078, 2
        %v1080 = vmax.f32 %v1078, %v1079
        %v1081 = vrot.slane %v1080, 1
        %v1082 = vmax.f32 %v1080, %v1081
        %v1083 = vsel %vm1068, %v1062, -inf
        %v1084 = vrot.slane %v1083, 4
        %v1085 = vmax.f32 %v1083, %v1084
        %v1086 = vrot.slane %v1085, 2
        %v1087 = vmax.f32 %v1085, %v1086
        %v1088 = vrot.slane %v1087, 1
        %v1089 = vmax.f32 %v1087, %v1088
        %v1090 = vsel %vm1068, %v1063, -inf
        %v1091 = vrot.slane %v1090, 4
        %v1092 = vmax.f32 %v1090, %v1091
        %v1093 = vrot.slane %v1092, 2
        %v1094 = vmax.f32 %v1092, %v1093
        %v1095 = vrot.slane %v1094, 1
        %v1096 = vmax.f32 %v1094, %v1095
        %v1097 = vsel %vm1068, %v1064, -inf
        %v1098 = vrot.slane %v1097, 4
        %v1099 = vmax.f32 %v1097, %v1098
        %v1100 = vrot.slane %v1099, 2
        %v1101 = vmax.f32 %v1099, %v1100
        %v1102 = vrot.slane %v1101, 1
        %v1103 = vmax.f32 %v1101, %v1102
        %v1104 = vsel %vm1068, %v1065, -inf
        %v1105 = vrot.slane %v1104, 4
        %v1106 = vmax.f32 %v1104, %v1105
        %v1107 = vrot.slane %v1106, 2
        %v1108 = vmax.f32 %v1106, %v1107
        %v1109 = vrot.slane %v1108, 1
        %v1110 = vmax.f32 %v1108, %v1109
        %v1111 = vsel %vm1068, %v1066, -inf
        %v1112 = vrot.slane %v1111, 4
        %v1113 = vmax.f32 %v1111, %v1112
        %v1114 = vrot.slane %v1113, 2
        %v1115 = vmax.f32 %v1113, %v1114
        %v1116 = vrot.slane %v1115, 1
        %v1117 = vmax.f32 %v1115, %v1116
        %v1118 = vsel %vm1068, %v1067, -inf
        %v1119 = vrot.slane %v1118, 4
        %v1120 = vmax.f32 %v1118, %v1119
        %v1121 = vrot.slane %v1120, 2
        %v1122 = vmax.f32 %v1120, %v1121
        %v1123 = vrot.slane %v1122, 1
        %v1124 = vmax.f32 %v1122, %v1123
        %v1125 = vsub.f32 %v1060, %v1075
        %v1126 = vsub.f32 %v1061, %v1082
        %v1127 = vsub.f32 %v1062, %v1089
        %v1128 = vsub.f32 %v1063, %v1096
        %v1129 = vsub.f32 %v1064, %v1103
        %v1130 = vsub.f32 %v1065, %v1110
        %v1131 = vsub.f32 %v1066, %v1117
        %v1132 = vsub.f32 %v1067, %v1124
        %v1133 = vmul.f32 %v1125, 1.442695
        %v1134 = vpow.pop %v1133
        %v1135 = vmul.f32 %v1126, 1.442695
        %v1136 = vpow.pop %v1135
        %v1137 = vmul.f32 %v1127, 1.442695
        %v1138 = vpow.pop %v1137
        %v1139 = vmul.f32 %v1128, 1.442695
        %v1140 = vpow.pop %v1139
        %v1141 = vmul.f32 %v1129, 1.442695
        %v1142 = vpow.pop %v1141
        %v1143 = vmul.f32 %v1130, 1.442695
        %v1144 = vpow.pop %v1143
        %v1145 = vmul.f32 %v1131, 1.442695
        %v1146 = vpow.pop %v1145
        %v1147 = vmul.f32 %v1132, 1.442695
        %v1148 = vpow.pop %v1147
        %v1149 = vsel %vm1068, %v1134, 0.0
        %v1150 = vrot.slane %v1149, 4
        %v1151 = vadd.f32 %v1149, %v1150
        %v1152 = vrot.slane %v1151, 2
        %v1153 = vadd.f32 %v1151, %v1152
        %v1154 = vrot.slane %v1153, 1
        %v1155 = vadd.f32 %v1153, %v1154
        %v1156 = vsel %vm1068, %v1136, 0.0
        %v1157 = vrot.slane %v1156, 4
        %v1158 = vadd.f32 %v1156, %v1157
        %v1159 = vrot.slane %v1158, 2
        %v1160 = vadd.f32 %v1158, %v1159
        %v1161 = vrot.slane %v1160, 1
        %v1162 = vadd.f32 %v1160, %v1161
        %v1163 = vsel %vm1068, %v1138, 0.0
        %v1164 = vrot.slane %v1163, 4
        %v1165 = vadd.f32 %v1163, %v1164
        %v1166 = vrot.slane %v1165, 2
        %v1167 = vadd.f32 %v1165, %v1166
        %v1168 = vrot.slane %v1167, 1
        %v1169 = vadd.f32 %v1167, %v1168
        %v1170 = vsel %vm1068, %v1140, 0.0
        %v1171 = vrot.slane %v1170, 4
        %v1172 = vadd.f32 %v1170, %v1171
        %v1173 = vrot.slane %v1172, 2
        %v1174 = vadd.f32 %v1172, %v1173
        %v1175 = vrot.slane %v1174, 1
        %v1176 = vadd.f32 %v1174, %v1175
        %v1177 = vsel %vm1068, %v1142, 0.0
        %v1178 = vrot.slane %v1177, 4
        %v1179 = vadd.f32 %v1177, %v1178
        %v1180 = vrot.slane %v1179, 2
        %v1181 = vadd.f32 %v1179, %v1180
        %v1182 = vrot.slane %v1181, 1
        %v1183 = vadd.f32 %v1181, %v1182
        %v1184 = vsel %vm1068, %v1144, 0.0
        %v1185 = vrot.slane %v1184, 4
        %v1186 = vadd.f32 %v1184, %v1185
        %v1187 = vrot.slane %v1186, 2
        %v1188 = vadd.f32 %v1186, %v1187
        %v1189 = vrot.slane %v1188, 1
        %v1190 = vadd.f32 %v1188, %v1189
        %v1191 = vsel %vm1068, %v1146, 0.0
        %v1192 = vrot.slane %v1191, 4
        %v1193 = vadd.f32 %v1191, %v1192
        %v1194 = vrot.slane %v1193, 2
        %v1195 = vadd.f32 %v1193, %v1194
        %v1196 = vrot.slane %v1195, 1
        %v1197 = vadd.f32 %v1195, %v1196
        %v1198 = vsel %vm1068, %v1148, 0.0
        %v1199 = vrot.slane %v1198, 4
        %v1200 = vadd.f32 %v1198, %v1199
        %v1201 = vrot.slane %v1200, 2
        %v1202 = vadd.f32 %v1200, %v1201
        %v1203 = vrot.slane %v1202, 1
        %v1204 = vadd.f32 %v1202, %v1203
        %v1205 = vrcp.pop %v1155
        %v1206 = vrcp.pop %v1162
        %v1207 = vrcp.pop %v1169
        %v1208 = vrcp.pop %v1176
        %v1209 = vrcp.pop %v1183
        %v1210 = vrcp.pop %v1190
        %v1211 = vrcp.pop %v1197
        %v1212 = vrcp.pop %v1204
        %v1213 = vmul.f32 %v1134, %v1205
        %v1214 = vmul.f32 %v1136, %v1206
        %v1215 = vmul.f32 %v1138, %v1207
        %v1216 = vmul.f32 %v1140, %v1208
        %v1217 = vmul.f32 %v1142, %v1209
        %v1218 = vmul.f32 %v1144, %v1210
        %v1219 = vmul.f32 %v1146, %v1211
        %v1220 = vmul.f32 %v1148, %v1212
        %v1221 = vld [vmem:[#allocation2] sm:$0xff]
        %1223 = vset.pattern.permute.xlu0 0
        %1224 = vperm.xlu0 %1223, %v1213
        %v1225 = vpop.permute.xlu0 %1224
        %1228 = vset.pattern.permute.xlu0 0
        %1229 = vperm.xlu0 %1228, %v1214
        %v1230 = vpop.permute.xlu0 %1229
        %1233 = vset.pattern.permute.xlu0 0
        %1234 = vperm.xlu0 %1233, %v1215
        %v1235 = vpop.permute.xlu0 %1234
        %1238 = vset.pattern.permute.xlu0 0
        %1239 = vperm.xlu0 %1238, %v1216
        %v1240 = vpop.permute.xlu0 %1239
        %1243 = vset.pattern.permute.xlu0 0
        %1244 = vperm.xlu0 %1243, %v1217
        %v1245 = vpop.permute.xlu0 %1244
        %1248 = vset.pattern.permute.xlu0 0
        %1249 = vperm.xlu0 %1248, %v1218
        %v1250 = vpop.permute.xlu0 %1249
        %1253 = vset.pattern.permute.xlu0 0
        %1254 = vperm.xlu0 %1253, %v1219
        %v1255 = vpop.permute.xlu0 %1254
        %1258 = vset.pattern.permute.xlu0 0
        %1259 = vperm.xlu0 %1258, %v1220
        %v1260 = vpop.permute.xlu0 %1259
        %v1262 = vmul.f32 %v463, %v1225
        %v1263 = vmul.f32 %v464, %v1230
        %v1264 = vmul.f32 %v465, %v1235
        %v1265 = vmul.f32 %v466, %v1240
        %v1266 = vmul.f32 %v467, %v1245
        %v1267 = vmul.f32 %v468, %v1250
        %v1268 = vmul.f32 %v469, %v1255
        %v1269 = vmul.f32 %v470, %v1260
        %v1270 = vsel %vm422, %v1262, 0.0
        %v1271 = vrot.slane %v1270, 4
        %v1272 = vadd.f32 %v1270, %v1271
        %v1273 = vrot.slane %v1272, 2
        %v1274 = vadd.f32 %v1272, %v1273
        %v1275 = vrot.slane %v1274, 1
        %v1276 = vadd.f32 %v1274, %v1275
        %v1277 = vsel %vm422, %v1263, 0.0
        %v1278 = vrot.slane %v1277, 4
        %v1279 = vadd.f32 %v1277, %v1278
        %v1280 = vrot.slane %v1279, 2
        %v1281 = vadd.f32 %v1279, %v1280
        %v1282 = vrot.slane %v1281, 1
        %v1283 = vadd.f32 %v1281, %v1282
        %v1284 = vsel %vm422, %v1264, 0.0
        %v1285 = vrot.slane %v1284, 4
        %v1286 = vadd.f32 %v1284, %v1285
        %v1287 = vrot.slane %v1286, 2
        %v1288 = vadd.f32 %v1286, %v1287
        %v1289 = vrot.slane %v1288, 1
        %v1290 = vadd.f32 %v1288, %v1289
        %v1291 = vsel %vm422, %v1265, 0.0
        %v1292 = vrot.slane %v1291, 4
        %v1293 = vadd.f32 %v1291, %v1292
        %v1294 = vrot.slane %v1293, 2
        %v1295 = vadd.f32 %v1293, %v1294
        %v1296 = vrot.slane %v1295, 1
        %v1297 = vadd.f32 %v1295, %v1296
        %v1298 = vsel %vm422, %v1266, 0.0
        %v1299 = vrot.slane %v1298, 4
        %v1300 = vadd.f32 %v1298, %v1299
        %v1301 = vrot.slane %v1300, 2
        %v1302 = vadd.f32 %v1300, %v1301
        %v1303 = vrot.slane %v1302, 1
        %v1304 = vadd.f32 %v1302, %v1303
        %v1305 = vsel %vm422, %v1267, 0.0
        %v1306 = vrot.slane %v1305, 4
        %v1307 = vadd.f32 %v1305, %v1306
        %v1308 = vrot.slane %v1307, 2
        %v1309 = vadd.f32 %v1307, %v1308
        %v1310 = vrot.slane %v1309, 1
        %v1311 = vadd.f32 %v1309, %v1310
        %v1312 = vsel %vm422, %v1268, 0.0
        %v1313 = vrot.slane %v1312, 4
        %v1314 = vadd.f32 %v1312, %v1313
        %v1315 = vrot.slane %v1314, 2
        %v1316 = vadd.f32 %v1314, %v1315
        %v1317 = vrot.slane %v1316, 1
        %v1318 = vadd.f32 %v1316, %v1317
        %v1319 = vsel %vm422, %v1269, 0.0
        %v1320 = vrot.slane %v1319, 4
        %v1321 = vadd.f32 %v1319, %v1320
        %v1322 = vrot.slane %v1321, 2
        %v1323 = vadd.f32 %v1321, %v1322
        %v1324 = vrot.slane %v1323, 1
        %v1325 = vadd.f32 %v1323, %v1324
        %vm1334 = vcmask 1041409
        %v1335 = vsel %vm1334, %v1283, %v1276
        %vm1336 = vcmask 1042434
        %v1337 = vsel %vm1336, %v1290, %v1335
        %vm1338 = vcmask 1043459
        %v1339 = vsel %vm1338, %v1297, %v1337
        %vm1340 = vcmask 1044484
        %v1341 = vsel %vm1340, %v1304, %v1339
        %vm1342 = vcmask 1045509
        %v1343 = vsel %vm1342, %v1311, %v1341
        %vm1344 = vcmask 1046534
        %v1345 = vsel %vm1344, %v1318, %v1343
        %vm1346 = vcmask 1047559
        %v1347 = vsel %vm1346, %v1325, %v1345
        %v1349 = vadd.f32 %v1221, %v1347
        %1350 = vst.msk [vmem:[#allocation2] sm:$0xff] %vm422, %v1349
        %p1351 = scmp.eq.s32.totalorder %s30, 1
        // Predicated region
        $region73: #{tpu_custom_call.1} parent=47 // pred_check
          %p1352 = pneg %p1351
        $region74: #{tpu_custom_call.1} parent=47 // pred_check_branch
          %1354 = sbr.rel (%p1352) target = $region76
        $region75: #{tpu_custom_call.1} parent=47 // pred_region
          %v1355 = vld [vmem:[#allocation2] sm:$0xff]
          %v1356 = vmul.f32 %v1355, %v1355
          %v1357 = vsel %vm422, %v1356, 0.0
          %1358 = vadd.xlane.f32.xlu0 %v1357
          %v1359 = vpop.xlane.xlu0 %1358
          %v1360 = vmax.f32 %v1359, 1e-24
          %v1361 = vrsqrt.pop %v1360
          %v1362 = vmul.f32 %v1355, %v1361
          %v1363 = vmul.f32 %v1362, 10.0
          %v1364 = vld [vmem:[#allocation3] sm:$0xff]
          %v1365 = vmul.f32 %v1363, %v1364
          %v1366 = vsel %vm422, %v1365, 0.0
          %1367 = vadd.xlane.f32.xlu0 %v1366
          %v1368 = vpop.xlane.xlu0 %1367
          %1369 = vst.msk [vmem:[%s399] sm:$0xff] %vm1068, %v1368
        $region76: #{tpu_custom_call.1} parent=47 // pred_fallthru
          _
        %p1370 = scmp.lt.s32.totalorder %s29, 0
        %s1371 = scalar_select %p1370, %s29, 0
        %s1372 = smul.addr %s1371, 8
        %s1373 = scalar_lea.vmem %s7, %s1372
        // Predicated region
        $region77: #{tpu_custom_call.1} parent=47 // pred_check
          %p1374 = pneg %p221
        $region78: #{tpu_custom_call.1} parent=47 // pred_check_branch
          %1376 = sbr.rel (%p1374) target = $region80
        $region79: #{tpu_custom_call.1} parent=47 // pred_region
          _
        $region80: #{tpu_custom_call.1} parent=47 // pred_fallthru
          _
        // Predicated region
        $region81: #{tpu_custom_call.1} parent=47 // pred_check
          %p1377 = pneg %p221
        $region82: #{tpu_custom_call.1} parent=47 // pred_check_branch
          %1379 = sbr.rel (%p1377) target = $region84
        $region83: #{tpu_custom_call.1} parent=47 // pred_region
          %p1380 = scmp.lt.s32.totalorder %s29, 0
          %s1381 = scalar_select %p1380, %s29, 0
          %s1382 = smul.addr %s1381, 8
          %s1383 = scalar_lea.vmem %s7, %s1382
        $region84: #{tpu_custom_call.1} parent=47 // pred_fallthru
          _
      $region48: #{tpu_custom_call.1} parent=5 // pred_fallthru
        _
      %p1384 = scmp.le.s32.totalorder 2, %s20
      // Predicated region
      $region85: #{tpu_custom_call.1} parent=5 // pred_check
        %p1385 = pneg %p1384
      $region86: #{tpu_custom_call.1} parent=5 // pred_check_branch
        %1387 = sbr.rel (%p1385) target = $region88
      $region87: #{tpu_custom_call.1} parent=5 // pred_region
        %s1388 = ssub.s32 %s20, 2
      $region88: #{tpu_custom_call.1} parent=5 // pred_fallthru
        _
    $region6: #{tpu_custom_call.1} parent=1 // loop_footer
      %s24 = sadd.s32 1, %s20
    $region7: #{tpu_custom_call.1} parent=1 // loop_footer_branch
      %19 = sbr.rel target = $region3
    $region8: #{tpu_custom_call.1} parent=1 // loop_exit
      _
    %1389 = vsyncpa [#allocation5], 1
    %s1390 = scalar_lea.sflag [#allocation5], 1
    %1391 = vsyncpa %s1390, 1
    %1392 = vsyncpa [#allocation7], 1
    %s1393 = scalar_lea.sflag [#allocation7], 1
    %1394 = vsyncpa %s1393, 1
    %1395 = vsyncpa [#allocation10], 1

</llo_original>
